<compile_context>
chip_gen: v6e
topology: v6e:2x2x1
jax: 0.10.0
libtpu: 0.0.40
codegen_flags: <defaults>
</compile_context>

<pallas_src>
import jax
import jax.numpy as jnp
from jax import lax
from jax.experimental import pallas as pl
from jax.experimental.pallas import tpu as pltpu


# ----------------------------------------------------------------------------
# Model configuration (small, consistent with the module's __init__)
# ----------------------------------------------------------------------------
NUM_TASKS = 3
NUM_CLASSES_PER_TASK = 4
PROTO_CHANNELS = 1
PROTO_SIZE = 8
SIZE_EMB = PROTO_SIZE * PROTO_SIZE * PROTO_CHANNELS * NUM_CLASSES_PER_TASK  # 256
HYPER_HIDDEN_FEATURES = 32
HYPER_HIDDEN_LAYERS = 1   # kernel has one distinct hidden layer; >1 would need per-layer weights
BACKBONE_FEATURES = 32    # backbone.num_features
CONV_OUT_CHANNELS = 8
IN_CHANNELS = 3
MEAN_INIT_PROTO = 0.0
STD_INIT_PROTO = 0.01

HEAD_OUT_DIM = NUM_CLASSES_PER_TASK * BACKBONE_FEATURES   # flattened classifier.weight (C*F)


# ----------------------------------------------------------------------------
# Single fused Pallas kernel: in-kernel im2col conv + GAP + FC + hypernet + head
# ----------------------------------------------------------------------------
def fused_forward(x_halo, z, w0, b0, w1, b1, w2, b2, cw9, cb, fw, fb,
                  tile_mat, blocksum, *, height, width):
    B, cin, L = x_halo.shape
    H, W = height, width
    HW = H * W
    OFF0 = W + 1                    # flat index of pixel (0, 0) inside the halo'd buffer
    C = NUM_CLASSES_PER_TASK
    F = BACKBONE_FEATURES
    COUT = CONV_OUT_CHANNELS
    f32 = jnp.float32

    def kernel(x_ref, z_ref, w0_ref, b0_ref, w1_ref, b1_ref, w2_ref, b2_ref,
               cw_ref, cb_ref, fw_ref, fb_ref, tile_ref, bsum_ref, out_ref):
        # ---- in-kernel im2col + 3x3 conv, channel-major (Cout, tokens) layout ----
        # Vertical out-of-image taps land in the physical zero halo; horizontal taps
        # need only two lane masks (dx = -1 / +1).
        col = lax.broadcasted_iota(jnp.int32, (1, HW), 1) % W
        mask_l = col >= 1            # neighbour at dx = -1 exists
        mask_r = col <= W - 2        # neighbour at dx = +1 exists

        conv = jnp.zeros((COUT, HW), f32)
        k = 0
        for dy in (-1, 0, 1):
            for dx in (-1, 0, 1):
                off = OFF0 + dy * W + dx                   # static, always >= 0
                piece = x_ref[0, :, pl.ds(off, HW)]        # (Cin, HW)
                if dx == -1:
                    piece = jnp.where(mask_l, piece, 0.0)
                elif dx == 1:
                    piece = jnp.where(mask_r, piece, 0.0)
                conv = conv + jnp.dot(cw_ref[k], piece, preferred_element_type=f32)
                k += 1
        conv = jnp.maximum(conv + cb_ref[...], 0.0)        # (Cout, HW)

        # ---- global average pool as an MXU contraction against a 1/HW row -------
        gap = jnp.full((1, HW), 1.0 / HW, dtype=f32)
        pooled = lax.dot_general(gap, conv, (((1,), (1,)), ((), ())),
                                 preferred_element_type=f32)                 # (1, Cout)

        # ---- backbone FC ----------------------------------------------------------
        feat = (jnp.dot(pooled, fw_ref[...], preferred_element_type=f32)
                + fb_ref[...])                                               # (1, F)

        # ---- hypernetwork MLP (tiny; recomputed per step -> megacore-safe) -------
        h = jnp.maximum(jnp.dot(z_ref[...], w0_ref[...], preferred_element_type=f32)
                        + b0_ref[...], 0.0)
        h = jnp.maximum(jnp.dot(h, w1_ref[...], preferred_element_type=f32)
                        + b1_ref[...], 0.0)
        w_flat = (jnp.dot(h, w2_ref[...], preferred_element_type=f32)
                  + b2_ref[...])                                             # (1, C*F) c-major

        # ---- task head: out = feat @ W.T, W generated in-kernel, no reshape ------
        # feat_rep[0, c*F + f] = feat[0, f]  (tile matrix), then block-sum over f.
        feat_rep = jnp.dot(feat, tile_ref[...], preferred_element_type=f32)  # (1, C*F)
        out_row = jnp.dot(feat_rep * w_flat, bsum_ref[...],
                          preferred_element_type=f32)                        # (1, C)
        out_ref[0] = out_row.astype(out_ref.dtype)

    consts = (z, w0, b0, w1, b1, w2, b2, cw9, cb, fw, fb, tile_mat, blocksum)

    def _const_spec(a):
        return pl.BlockSpec(a.shape, lambda b, _nd=a.ndim: (0,) * _nd)

    in_specs = ([pl.BlockSpec((1, cin, L), lambda b: (b, 0, 0))]
                + [_const_spec(a) for a in consts])

    flops_per_img = (2 * 9 * COUT * cin * HW          # conv
                     + 2 * COUT * HW                  # GAP
                     + 2 * COUT * F                   # backbone FC
                     + 2 * (SIZE_EMB * HYPER_HIDDEN_FEATURES
                            + HYPER_HIDDEN_FEATURES * HYPER_HIDDEN_FEATURES
                            + HYPER_HIDDEN_FEATURES * C * F)   # hypernet
                     + 2 * (F * C * F + C * F * C))   # head (tile + blocksum matmuls)
    bytes_accessed = 4 * (x_halo.size + sum(a.size for a in consts) + B * C)
    cost = pl.CostEstimate(flops=B * flops_per_img, transcendentals=0,
                           bytes_accessed=bytes_accessed)

    return pl.pallas_call(
        kernel,
        out_shape=jax.ShapeDtypeStruct((B, 1, C), jnp.float32),
        grid=(B,),
        in_specs=in_specs,
        out_specs=pl.BlockSpec((1, 1, C), lambda b: (b, 0, 0)),
        compiler_params=pltpu.CompilerParams(
            dimension_semantics=("parallel",),      # v7x: both TensorCores split the batch
            vmem_limit_bytes=32 * 1024 * 1024),
        cost_estimate=cost,
    )(x_halo, *consts)


# ----------------------------------------------------------------------------
# Parameters
# ----------------------------------------------------------------------------
def init_params(key):
    ks = jax.random.split(key, 6)
    p = {}
    # task embeddings: nn.Embedding(num_tasks, size_emb), normal(mean, std)
    p["hyper_emb"] = (MEAN_INIT_PROTO
                      + STD_INIT_PROTO * jax.random.normal(ks[0], (NUM_TASKS, SIZE_EMB),
                                                           dtype=jnp.float32))
    # hypernet FCBlock: in -> hidden (+ReLU), hidden -> hidden (+ReLU), hidden -> C*F
    p["hn_w0"] = 0.05 * jax.random.normal(ks[1], (SIZE_EMB, HYPER_HIDDEN_FEATURES), jnp.float32)
    p["hn_b0"] = jnp.zeros((HYPER_HIDDEN_FEATURES,), jnp.float32)
    p["hn_w1"] = 0.05 * jax.random.normal(ks[2], (HYPER_HIDDEN_FEATURES, HYPER_HIDDEN_FEATURES),
                                          jnp.float32)
    p["hn_b1"] = jnp.zeros((HYPER_HIDDEN_FEATURES,), jnp.float32)
    p["hn_w2"] = 0.05 * jax.random.normal(ks[3], (HYPER_HIDDEN_FEATURES, HEAD_OUT_DIM),
                                          jnp.float32)
    p["hn_b2"] = jnp.zeros((HEAD_OUT_DIM,), jnp.float32)
    # backbone stand-in: conv3x3(3 -> Cout) + ReLU, GAP, Linear(Cout -> num_features)
    p["conv_w"] = 0.1 * jax.random.normal(ks[4], (CONV_OUT_CHANNELS, IN_CHANNELS, 3, 3),
                                          jnp.float32)
    p["conv_b"] = jnp.zeros((CONV_OUT_CHANNELS,), jnp.float32)
    p["bb_fc_w"] = 0.1 * jax.random.normal(ks[5], (CONV_OUT_CHANNELS, BACKBONE_FEATURES),
                                           jnp.float32)
    p["bb_fc_b"] = jnp.zeros((BACKBONE_FEATURES,), jnp.float32)
    return p


# ----------------------------------------------------------------------------
# Forward pass (wrapper)
# ----------------------------------------------------------------------------
def forward(params, support_set, task_idx):
    """Forward pass; task_idx is a traced int32 scalar (no per-task recompilation)."""
    B, cin, H, W = support_set.shape
    assert cin == IN_CHANNELS
    HW = H * W
    C = NUM_CLASSES_PER_TASK
    F = BACKBONE_FEATURES

    # embedding lookup (tiny gather in plain JAX)
    z = jnp.take(params["hyper_emb"], task_idx, axis=0)[None, :].astype(jnp.float32)  # (1, 256)

    # Raw pixels flattened to (Cin, H*W) plus a one-row (+1 element) zero halo on each side:
    # pixel (h, w) sits at flat index (W+1) + h*W + w, so every 3x3 neighbour of a token is a
    # static lane offset; vertical out-of-image taps land in the zero halo, horizontal ones are
    # masked in-kernel.  No (B*H*W, 27) im2col tensor is ever materialized in HBM.
    x_flat = support_set.astype(jnp.float32).reshape(B, cin, HW)
    x_halo = jnp.pad(x_flat, ((0, 0), (0, 0), (W + 1, W + 1)))

    # conv weight as (9, Cout, Cin): k = kh*3 + kw tap-major, ready for per-tap matmuls
    cw9 = jnp.transpose(params["conv_w"], (2, 3, 0, 1)).reshape(9, CONV_OUT_CHANNELS, IN_CHANNELS)
    cb = params["conv_b"].reshape(CONV_OUT_CHANNELS, 1)
    b0 = params["hn_b0"].reshape(1, -1)
    b1 = params["hn_b1"].reshape(1, -1)
    b2 = params["hn_b2"].reshape(1, -1)
    fb = params["bb_fc_b"].reshape(1, -1)

    # constants for the reshape-free task head (out = feat @ W.T with W generated in-kernel)
    j = jnp.arange(C * F, dtype=jnp.int32)
    tile_mat = (j[None, :] % F == jnp.arange(F, dtype=jnp.int32)[:, None]).astype(jnp.float32)
    blocksum = (j[:, None] // F == jnp.arange(C, dtype=jnp.int32)[None, :]).astype(jnp.float32)

    out3 = fused_forward(x_halo, z,
                         params["hn_w0"], b0, params["hn_w1"], b1, params["hn_w2"], b2,
                         cw9, cb, params["bb_fc_w"], fb, tile_mat, blocksum,
                         height=H, width=W)

    # prototypes = z.reshape(C, PROTO_CHANNELS, PROTO_SIZE, PROTO_SIZE)  (stored by the torch
    # module as self.learned_prototyes, not returned)
    return out3.reshape(B, C)                                  # == task_head_out.squeeze(0)


# ----------------------------------------------------------------------------
# Pure-JAX reference of the same forward (for correctness checking)
# ----------------------------------------------------------------------------
def reference_forward(params, support_set, task_idx):
    with jax.default_matmul_precision("highest"):
        B, cin, H, W = support_set.shape
        C = NUM_CLASSES_PER_TASK
        F = BACKBONE_FEATURES
        z = jnp.take(params["hyper_emb"], task_idx, axis=0)[None, :]
        h = jax.nn.relu(z @ params["hn_w0"] + params["hn_b0"][None, :])
        h = jax.nn.relu(h @ params["hn_w1"] + params["hn_b1"][None, :])
        w_flat = h @ params["hn_w2"] + params["hn_b2"][None, :]
        w_cls = w_flat.reshape(C, F)                            # classifier.weight (C, F)

        x = support_set.astype(jnp.float32)
        xp = jnp.pad(x, ((0, 0), (0, 0), (1, 1), (1, 1)))
        conv = jnp.zeros((B, CONV_OUT_CHANNELS, H, W), jnp.float32)
        for kh in range(3):
            for kw in range(3):
                patch = xp[:, :, kh:kh + H, kw:kw + W]
                conv = conv + jnp.einsum("oc,bchw->bohw",
                                         params["conv_w"][:, :, kh, kw], patch)
        conv = jax.nn.relu(conv + params["conv_b"][None, :, None, None])
        pooled = conv.mean(axis=(2, 3))                                   # (B, Cout)
        feats = pooled @ params["bb_fc_w"] + params["bb_fc_b"][None, :]   # (B, F)
        return feats @ w_cls.T                                            # (B, C)


# ----------------------------------------------------------------------------
if __name__ == "__main__":
    key = jax.random.PRNGKey(0)
    k_params, k_data = jax.random.split(key)

    params = init_params(k_params)
    support_set = jax.random.normal(k_data, (2, IN_CHANNELS, 16, 16), dtype=jnp.float32)
    task_idx = jnp.int32(1)

    out = jax.jit(forward)(params, support_set, task_idx)
    out = jax.block_until_ready(out)

    assert out.shape == (2, NUM_CLASSES_PER_TASK), out.shape
    assert out.dtype == jnp.float32
    assert bool(jnp.all(jnp.isfinite(out)))

    ref = jax.jit(reference_forward)(params, support_set, task_idx)
    ref = jax.block_until_ready(ref)
    assert bool(jnp.allclose(out, ref, rtol=1e-2, atol=1e-5)), (out, ref)

    print("KERNEL_OK")
</pallas_src>

<mosaic_0001>
module attributes {stable_mosaic.version = 11 : i64} {
  func.func @kernel(%arg0: i32, %arg1: memref<1x3x290xf32, #tpu.memory_space<vmem>>, %arg2: memref<1x256xf32, #tpu.memory_space<vmem>>, %arg3: memref<256x32xf32, #tpu.memory_space<vmem>>, %arg4: memref<1x32xf32, #tpu.memory_space<vmem>>, %arg5: memref<32x32xf32, #tpu.memory_space<vmem>>, %arg6: memref<1x32xf32, #tpu.memory_space<vmem>>, %arg7: memref<32x128xf32, #tpu.memory_space<vmem>>, %arg8: memref<1x128xf32, #tpu.memory_space<vmem>>, %arg9: memref<9x8x3xf32, #tpu.memory_space<vmem>>, %arg10: memref<8x1xf32, #tpu.memory_space<vmem>>, %arg11: memref<8x32xf32, #tpu.memory_space<vmem>>, %arg12: memref<1x32xf32, #tpu.memory_space<vmem>>, %arg13: memref<32x128xf32, #tpu.memory_space<vmem>>, %arg14: memref<128x4xf32, #tpu.memory_space<vmem>>, %arg15: memref<1x1x4xf32, #tpu.memory_space<vmem>>) attributes {dimension_semantics = [#tpu.dimension_semantics<parallel>], iteration_bounds = array<i64: 2>, scalar_prefetch = 0 : i64, scratch_operands = 0 : i64, tpu.core_type = #tpu.core_type<tc>, window_params = [{transform_indices = @transform_0, window_bounds = array<i64: 1, 3, 290>}, {pipeline_mode = #tpu.pipeline_mode<synchronous>, transform_indices = @transform_1, window_bounds = array<i64: 1, 256>}, {pipeline_mode = #tpu.pipeline_mode<synchronous>, transform_indices = @transform_2, window_bounds = array<i64: 256, 32>}, {pipeline_mode = #tpu.pipeline_mode<synchronous>, transform_indices = @transform_3, window_bounds = array<i64: 1, 32>}, {pipeline_mode = #tpu.pipeline_mode<synchronous>, transform_indices = @transform_4, window_bounds = array<i64: 32, 32>}, {pipeline_mode = #tpu.pipeline_mode<synchronous>, transform_indices = @transform_5, window_bounds = array<i64: 1, 32>}, {pipeline_mode = #tpu.pipeline_mode<synchronous>, transform_indices = @transform_6, window_bounds = array<i64: 32, 128>}, {pipeline_mode = #tpu.pipeline_mode<synchronous>, transform_indices = @transform_7, window_bounds = array<i64: 1, 128>}, {pipeline_mode = #tpu.pipeline_mode<synchronous>, transform_indices = @transform_8, window_bounds = array<i64: 9, 8, 3>}, {pipeline_mode = #tpu.pipeline_mode<synchronous>, transform_indices = @transform_9, window_bounds = array<i64: 8, 1>}, {pipeline_mode = #tpu.pipeline_mode<synchronous>, transform_indices = @transform_10, window_bounds = array<i64: 8, 32>}, {pipeline_mode = #tpu.pipeline_mode<synchronous>, transform_indices = @transform_11, window_bounds = array<i64: 1, 32>}, {pipeline_mode = #tpu.pipeline_mode<synchronous>, transform_indices = @transform_12, window_bounds = array<i64: 32, 128>}, {pipeline_mode = #tpu.pipeline_mode<synchronous>, transform_indices = @transform_13, window_bounds = array<i64: 128, 4>}, {transform_indices = @transform_14, window_bounds = array<i64: 1, 1, 4>}]} {
    %0 = tpu.iota {dimensions = array<i32: 1>} : vector<1x256xi32>
    %c16_i32 = arith.constant 16 : i32
    %c0_i32 = arith.constant 0 : i32
    %1 = arith.cmpi eq, %c16_i32, %c0_i32 : i32
    %c1_i32 = arith.constant 1 : i32
    %2 = arith.select %1, %c1_i32, %c16_i32 : i32
    %3 = vector.broadcast %2 : i32 to vector<1x256xi32>
    %4 = arith.remsi %0, %3 : vector<1x256xi32>
    %c0_i32_0 = arith.constant 0 : i32
    %5 = vector.broadcast %c0_i32_0 : i32 to vector<1x256xi32>
    %6 = arith.cmpi ne, %4, %5 : vector<1x256xi32>
    %c0_i32_1 = arith.constant 0 : i32
    %7 = vector.broadcast %c0_i32_1 : i32 to vector<1x256xi32>
    %8 = arith.cmpi slt, %4, %7 : vector<1x256xi32>
    %c0_i32_2 = arith.constant 0 : i32
    %9 = arith.cmpi slt, %2, %c0_i32_2 : i32
    %10 = vector.broadcast %9 : i1 to vector<1x256xi1>
    %11 = vector.broadcast %10 : vector<1x256xi1> to vector<1x256xi1>
    %12 = arith.xori %8, %11 : vector<1x256xi1>
    %13 = arith.andi %12, %6 : vector<1x256xi1>
    %14 = vector.broadcast %2 : i32 to vector<1x256xi32>
    %15 = arith.addi %4, %14 : vector<1x256xi32>
    %16 = arith.select %13, %15, %4 : vector<1x256xi1>, vector<1x256xi32>
    %c1_i32_3 = arith.constant 1 : i32
    %17 = vector.broadcast %c1_i32_3 : i32 to vector<1x256xi32>
    %18 = arith.cmpi sge, %16, %17 : vector<1x256xi32>
    %c14_i32 = arith.constant 14 : i32
    %19 = vector.broadcast %c14_i32 : i32 to vector<1x256xi32>
    %20 = arith.cmpi sle, %16, %19 : vector<1x256xi32>
    %cst = arith.constant 0.000000e+00 : f32
    %21 = vector.broadcast %cst : f32 to vector<8x256xf32>
    %c0 = arith.constant 0 : index
    %c0_4 = arith.constant 0 : index
    %c0_5 = arith.constant 0 : index
    %22 = vector.load %arg1[%c0, %c0_4, %c0_5] : memref<1x3x290xf32, #tpu.memory_space<vmem>>, vector<1x3x256xf32>
    %23 = vector.shape_cast %22 : vector<1x3x256xf32> to vector<3x256xf32>
    %cst_6 = arith.constant 0.000000e+00 : f32
    %24 = vector.shape_cast %18 : vector<1x256xi1> to vector<1x256xi1>
    %25 = vector.broadcast %24 : vector<1x256xi1> to vector<3x256xi1>
    %26 = vector.broadcast %cst_6 : f32 to vector<3x256xf32>
    %27 = arith.select %25, %23, %26 : vector<3x256xi1>, vector<3x256xf32>
    %c0_7 = arith.constant 0 : index
    %c0_8 = arith.constant 0 : index
    %c0_9 = arith.constant 0 : index
    %28 = vector.load %arg9[%c0_7, %c0_8, %c0_9] : memref<9x8x3xf32, #tpu.memory_space<vmem>>, vector<1x8x3xf32>
    %29 = vector.shape_cast %28 : vector<1x8x3xf32> to vector<8x3xf32>
    %cst_10 = arith.constant dense<0.000000e+00> : vector<8x256xf32>
    %30 = tpu.matmul %29, %27, %cst_10 {dimension_numbers = #tpu.dot_dimension_numbers<[1], [0], [0], [1], [0, 0, 1, 1], [], []>} : vector<8x3xf32>, vector<3x256xf32>, vector<8x256xf32> -> vector<8x256xf32>
    %31 = arith.addf %21, %30 : vector<8x256xf32>
    %c0_11 = arith.constant 0 : index
    %c0_12 = arith.constant 0 : index
    %c1 = arith.constant 1 : index
    %32 = vector.load %arg1[%c0_11, %c0_12, %c1] : memref<1x3x290xf32, #tpu.memory_space<vmem>>, vector<1x3x256xf32>
    %33 = vector.shape_cast %32 : vector<1x3x256xf32> to vector<3x256xf32>
    %c1_13 = arith.constant 1 : index
    %c0_14 = arith.constant 0 : index
    %c0_15 = arith.constant 0 : index
    %34 = vector.load %arg9[%c1_13, %c0_14, %c0_15] : memref<9x8x3xf32, #tpu.memory_space<vmem>>, vector<1x8x3xf32>
    %35 = vector.shape_cast %34 : vector<1x8x3xf32> to vector<8x3xf32>
    %cst_16 = arith.constant dense<0.000000e+00> : vector<8x256xf32>
    %36 = tpu.matmul %35, %33, %cst_16 {dimension_numbers = #tpu.dot_dimension_numbers<[1], [0], [0], [1], [0, 0, 1, 1], [], []>} : vector<8x3xf32>, vector<3x256xf32>, vector<8x256xf32> -> vector<8x256xf32>
    %37 = arith.addf %31, %36 : vector<8x256xf32>
    %c0_17 = arith.constant 0 : index
    %c0_18 = arith.constant 0 : index
    %c2 = arith.constant 2 : index
    %38 = vector.load %arg1[%c0_17, %c0_18, %c2] : memref<1x3x290xf32, #tpu.memory_space<vmem>>, vector<1x3x256xf32>
    %39 = vector.shape_cast %38 : vector<1x3x256xf32> to vector<3x256xf32>
    %cst_19 = arith.constant 0.000000e+00 : f32
    %40 = vector.shape_cast %20 : vector<1x256xi1> to vector<1x256xi1>
    %41 = vector.broadcast %40 : vector<1x256xi1> to vector<3x256xi1>
    %42 = vector.broadcast %cst_19 : f32 to vector<3x256xf32>
    %43 = arith.select %41, %39, %42 : vector<3x256xi1>, vector<3x256xf32>
    %c2_20 = arith.constant 2 : index
    %c0_21 = arith.constant 0 : index
    %c0_22 = arith.constant 0 : index
    %44 = vector.load %arg9[%c2_20, %c0_21, %c0_22] : memref<9x8x3xf32, #tpu.memory_space<vmem>>, vector<1x8x3xf32>
    %45 = vector.shape_cast %44 : vector<1x8x3xf32> to vector<8x3xf32>
    %cst_23 = arith.constant dense<0.000000e+00> : vector<8x256xf32>
    %46 = tpu.matmul %45, %43, %cst_23 {dimension_numbers = #tpu.dot_dimension_numbers<[1], [0], [0], [1], [0, 0, 1, 1], [], []>} : vector<8x3xf32>, vector<3x256xf32>, vector<8x256xf32> -> vector<8x256xf32>
    %47 = arith.addf %37, %46 : vector<8x256xf32>
    %c0_24 = arith.constant 0 : index
    %c0_25 = arith.constant 0 : index
    %c16 = arith.constant 16 : index
    %48 = vector.load %arg1[%c0_24, %c0_25, %c16] : memref<1x3x290xf32, #tpu.memory_space<vmem>>, vector<1x3x256xf32>
    %49 = vector.shape_cast %48 : vector<1x3x256xf32> to vector<3x256xf32>
    %cst_26 = arith.constant 0.000000e+00 : f32
    %50 = vector.shape_cast %18 : vector<1x256xi1> to vector<1x256xi1>
    %51 = vector.broadcast %50 : vector<1x256xi1> to vector<3x256xi1>
    %52 = vector.broadcast %cst_26 : f32 to vector<3x256xf32>
    %53 = arith.select %51, %49, %52 : vector<3x256xi1>, vector<3x256xf32>
    %c3 = arith.constant 3 : index
    %c0_27 = arith.constant 0 : index
    %c0_28 = arith.constant 0 : index
    %54 = vector.load %arg9[%c3, %c0_27, %c0_28] : memref<9x8x3xf32, #tpu.memory_space<vmem>>, vector<1x8x3xf32>
    %55 = vector.shape_cast %54 : vector<1x8x3xf32> to vector<8x3xf32>
    %cst_29 = arith.constant dense<0.000000e+00> : vector<8x256xf32>
    %56 = tpu.matmul %55, %53, %cst_29 {dimension_numbers = #tpu.dot_dimension_numbers<[1], [0], [0], [1], [0, 0, 1, 1], [], []>} : vector<8x3xf32>, vector<3x256xf32>, vector<8x256xf32> -> vector<8x256xf32>
    %57 = arith.addf %47, %56 : vector<8x256xf32>
    %c0_30 = arith.constant 0 : index
    %c0_31 = arith.constant 0 : index
    %c17 = arith.constant 17 : index
    %58 = vector.load %arg1[%c0_30, %c0_31, %c17] : memref<1x3x290xf32, #tpu.memory_space<vmem>>, vector<1x3x256xf32>
    %59 = vector.shape_cast %58 : vector<1x3x256xf32> to vector<3x256xf32>
    %c4 = arith.constant 4 : index
    %c0_32 = arith.constant 0 : index
    %c0_33 = arith.constant 0 : index
    %60 = vector.load %arg9[%c4, %c0_32, %c0_33] : memref<9x8x3xf32, #tpu.memory_space<vmem>>, vector<1x8x3xf32>
    %61 = vector.shape_cast %60 : vector<1x8x3xf32> to vector<8x3xf32>
    %cst_34 = arith.constant dense<0.000000e+00> : vector<8x256xf32>
    %62 = tpu.matmul %61, %59, %cst_34 {dimension_numbers = #tpu.dot_dimension_numbers<[1], [0], [0], [1], [0, 0, 1, 1], [], []>} : vector<8x3xf32>, vector<3x256xf32>, vector<8x256xf32> -> vector<8x256xf32>
    %63 = arith.addf %57, %62 : vector<8x256xf32>
    %c0_35 = arith.constant 0 : index
    %c0_36 = arith.constant 0 : index
    %c18 = arith.constant 18 : index
    %64 = vector.load %arg1[%c0_35, %c0_36, %c18] : memref<1x3x290xf32, #tpu.memory_space<vmem>>, vector<1x3x256xf32>
    %65 = vector.shape_cast %64 : vector<1x3x256xf32> to vector<3x256xf32>
    %cst_37 = arith.constant 0.000000e+00 : f32
    %66 = vector.shape_cast %20 : vector<1x256xi1> to vector<1x256xi1>
    %67 = vector.broadcast %66 : vector<1x256xi1> to vector<3x256xi1>
    %68 = vector.broadcast %cst_37 : f32 to vector<3x256xf32>
    %69 = arith.select %67, %65, %68 : vector<3x256xi1>, vector<3x256xf32>
    %c5 = arith.constant 5 : index
    %c0_38 = arith.constant 0 : index
    %c0_39 = arith.constant 0 : index
    %70 = vector.load %arg9[%c5, %c0_38, %c0_39] : memref<9x8x3xf32, #tpu.memory_space<vmem>>, vector<1x8x3xf32>
    %71 = vector.shape_cast %70 : vector<1x8x3xf32> to vector<8x3xf32>
    %cst_40 = arith.constant dense<0.000000e+00> : vector<8x256xf32>
    %72 = tpu.matmul %71, %69, %cst_40 {dimension_numbers = #tpu.dot_dimension_numbers<[1], [0], [0], [1], [0, 0, 1, 1], [], []>} : vector<8x3xf32>, vector<3x256xf32>, vector<8x256xf32> -> vector<8x256xf32>
    %73 = arith.addf %63, %72 : vector<8x256xf32>
    %c0_41 = arith.constant 0 : index
    %c0_42 = arith.constant 0 : index
    %c32 = arith.constant 32 : index
    %74 = vector.load %arg1[%c0_41, %c0_42, %c32] : memref<1x3x290xf32, #tpu.memory_space<vmem>>, vector<1x3x256xf32>
    %75 = vector.shape_cast %74 : vector<1x3x256xf32> to vector<3x256xf32>
    %cst_43 = arith.constant 0.000000e+00 : f32
    %76 = vector.shape_cast %18 : vector<1x256xi1> to vector<1x256xi1>
    %77 = vector.broadcast %76 : vector<1x256xi1> to vector<3x256xi1>
    %78 = vector.broadcast %cst_43 : f32 to vector<3x256xf32>
    %79 = arith.select %77, %75, %78 : vector<3x256xi1>, vector<3x256xf32>
    %c6 = arith.constant 6 : index
    %c0_44 = arith.constant 0 : index
    %c0_45 = arith.constant 0 : index
    %80 = vector.load %arg9[%c6, %c0_44, %c0_45] : memref<9x8x3xf32, #tpu.memory_space<vmem>>, vector<1x8x3xf32>
    %81 = vector.shape_cast %80 : vector<1x8x3xf32> to vector<8x3xf32>
    %cst_46 = arith.constant dense<0.000000e+00> : vector<8x256xf32>
    %82 = tpu.matmul %81, %79, %cst_46 {dimension_numbers = #tpu.dot_dimension_numbers<[1], [0], [0], [1], [0, 0, 1, 1], [], []>} : vector<8x3xf32>, vector<3x256xf32>, vector<8x256xf32> -> vector<8x256xf32>
    %83 = arith.addf %73, %82 : vector<8x256xf32>
    %c0_47 = arith.constant 0 : index
    %c0_48 = arith.constant 0 : index
    %c33 = arith.constant 33 : index
    %84 = vector.load %arg1[%c0_47, %c0_48, %c33] : memref<1x3x290xf32, #tpu.memory_space<vmem>>, vector<1x3x256xf32>
    %85 = vector.shape_cast %84 : vector<1x3x256xf32> to vector<3x256xf32>
    %c7 = arith.constant 7 : index
    %c0_49 = arith.constant 0 : index
    %c0_50 = arith.constant 0 : index
    %86 = vector.load %arg9[%c7, %c0_49, %c0_50] : memref<9x8x3xf32, #tpu.memory_space<vmem>>, vector<1x8x3xf32>
    %87 = vector.shape_cast %86 : vector<1x8x3xf32> to vector<8x3xf32>
    %cst_51 = arith.constant dense<0.000000e+00> : vector<8x256xf32>
    %88 = tpu.matmul %87, %85, %cst_51 {dimension_numbers = #tpu.dot_dimension_numbers<[1], [0], [0], [1], [0, 0, 1, 1], [], []>} : vector<8x3xf32>, vector<3x256xf32>, vector<8x256xf32> -> vector<8x256xf32>
    %89 = arith.addf %83, %88 : vector<8x256xf32>
    %c0_52 = arith.constant 0 : index
    %c0_53 = arith.constant 0 : index
    %c34 = arith.constant 34 : index
    %90 = vector.load %arg1[%c0_52, %c0_53, %c34] : memref<1x3x290xf32, #tpu.memory_space<vmem>>, vector<1x3x256xf32>
    %91 = vector.shape_cast %90 : vector<1x3x256xf32> to vector<3x256xf32>
    %cst_54 = arith.constant 0.000000e+00 : f32
    %92 = vector.shape_cast %20 : vector<1x256xi1> to vector<1x256xi1>
    %93 = vector.broadcast %92 : vector<1x256xi1> to vector<3x256xi1>
    %94 = vector.broadcast %cst_54 : f32 to vector<3x256xf32>
    %95 = arith.select %93, %91, %94 : vector<3x256xi1>, vector<3x256xf32>
    %c8 = arith.constant 8 : index
    %c0_55 = arith.constant 0 : index
    %c0_56 = arith.constant 0 : index
    %96 = vector.load %arg9[%c8, %c0_55, %c0_56] : memref<9x8x3xf32, #tpu.memory_space<vmem>>, vector<1x8x3xf32>
    %97 = vector.shape_cast %96 : vector<1x8x3xf32> to vector<8x3xf32>
    %cst_57 = arith.constant dense<0.000000e+00> : vector<8x256xf32>
    %98 = tpu.matmul %97, %95, %cst_57 {dimension_numbers = #tpu.dot_dimension_numbers<[1], [0], [0], [1], [0, 0, 1, 1], [], []>} : vector<8x3xf32>, vector<3x256xf32>, vector<8x256xf32> -> vector<8x256xf32>
    %99 = arith.addf %89, %98 : vector<8x256xf32>
    %c0_58 = arith.constant 0 : index
    %c0_59 = arith.constant 0 : index
    %100 = vector.load %arg10[%c0_58, %c0_59] : memref<8x1xf32, #tpu.memory_space<vmem>>, vector<8x1xf32>
    %101 = vector.broadcast %100 : vector<8x1xf32> to vector<8x256xf32>
    %102 = arith.addf %99, %101 : vector<8x256xf32>
    %cst_60 = arith.constant 0.000000e+00 : f32
    %103 = vector.broadcast %cst_60 : f32 to vector<8x256xf32>
    %104 = arith.maximumf %102, %103 : vector<8x256xf32>
    %cst_61 = arith.constant 3.906250e-03 : f32
    %105 = vector.broadcast %cst_61 : f32 to vector<1x256xf32>
    %cst_62 = arith.constant dense<0.000000e+00> : vector<1x8xf32>
    %106 = tpu.matmul %105, %104, %cst_62 {dimension_numbers = #tpu.dot_dimension_numbers<[1], [1], [0], [0], [0, 0, 1, 0], [], []>} : vector<1x256xf32>, vector<8x256xf32>, vector<1x8xf32> -> vector<1x8xf32>
    %c0_63 = arith.constant 0 : index
    %c0_64 = arith.constant 0 : index
    %107 = vector.load %arg11[%c0_63, %c0_64] : memref<8x32xf32, #tpu.memory_space<vmem>>, vector<8x32xf32>
    %cst_65 = arith.constant dense<0.000000e+00> : vector<1x32xf32>
    %108 = tpu.matmul %106, %107, %cst_65 {dimension_numbers = #tpu.dot_dimension_numbers<[1], [0], [0], [1], [0, 0, 1, 1], [], []>} : vector<1x8xf32>, vector<8x32xf32>, vector<1x32xf32> -> vector<1x32xf32>
    %c0_66 = arith.constant 0 : index
    %c0_67 = arith.constant 0 : index
    %109 = vector.load %arg12[%c0_66, %c0_67] : memref<1x32xf32, #tpu.memory_space<vmem>>, vector<1x32xf32>
    %110 = arith.addf %108, %109 : vector<1x32xf32>
    %c0_68 = arith.constant 0 : index
    %c0_69 = arith.constant 0 : index
    %111 = vector.load %arg2[%c0_68, %c0_69] : memref<1x256xf32, #tpu.memory_space<vmem>>, vector<1x256xf32>
    %c0_70 = arith.constant 0 : index
    %c0_71 = arith.constant 0 : index
    %112 = vector.load %arg3[%c0_70, %c0_71] : memref<256x32xf32, #tpu.memory_space<vmem>>, vector<256x32xf32>
    %cst_72 = arith.constant dense<0.000000e+00> : vector<1x32xf32>
    %113 = tpu.matmul %111, %112, %cst_72 {dimension_numbers = #tpu.dot_dimension_numbers<[1], [0], [0], [1], [0, 0, 1, 1], [], []>} : vector<1x256xf32>, vector<256x32xf32>, vector<1x32xf32> -> vector<1x32xf32>
    %c0_73 = arith.constant 0 : index
    %c0_74 = arith.constant 0 : index
    %114 = vector.load %arg4[%c0_73, %c0_74] : memref<1x32xf32, #tpu.memory_space<vmem>>, vector<1x32xf32>
    %115 = arith.addf %113, %114 : vector<1x32xf32>
    %cst_75 = arith.constant 0.000000e+00 : f32
    %116 = vector.broadcast %cst_75 : f32 to vector<1x32xf32>
    %117 = arith.maximumf %115, %116 : vector<1x32xf32>
    %c0_76 = arith.constant 0 : index
    %c0_77 = arith.constant 0 : index
    %118 = vector.load %arg5[%c0_76, %c0_77] : memref<32x32xf32, #tpu.memory_space<vmem>>, vector<32x32xf32>
    %cst_78 = arith.constant dense<0.000000e+00> : vector<1x32xf32>
    %119 = tpu.matmul %117, %118, %cst_78 {dimension_numbers = #tpu.dot_dimension_numbers<[1], [0], [0], [1], [0, 0, 1, 1], [], []>} : vector<1x32xf32>, vector<32x32xf32>, vector<1x32xf32> -> vector<1x32xf32>
    %c0_79 = arith.constant 0 : index
    %c0_80 = arith.constant 0 : index
    %120 = vector.load %arg6[%c0_79, %c0_80] : memref<1x32xf32, #tpu.memory_space<vmem>>, vector<1x32xf32>
    %121 = arith.addf %119, %120 : vector<1x32xf32>
    %cst_81 = arith.constant 0.000000e+00 : f32
    %122 = vector.broadcast %cst_81 : f32 to vector<1x32xf32>
    %123 = arith.maximumf %121, %122 : vector<1x32xf32>
    %c0_82 = arith.constant 0 : index
    %c0_83 = arith.constant 0 : index
    %124 = vector.load %arg7[%c0_82, %c0_83] : memref<32x128xf32, #tpu.memory_space<vmem>>, vector<32x128xf32>
    %cst_84 = arith.constant dense<0.000000e+00> : vector<1x128xf32>
    %125 = tpu.matmul %123, %124, %cst_84 {dimension_numbers = #tpu.dot_dimension_numbers<[1], [0], [0], [1], [0, 0, 1, 1], [], []>} : vector<1x32xf32>, vector<32x128xf32>, vector<1x128xf32> -> vector<1x128xf32>
    %c0_85 = arith.constant 0 : index
    %c0_86 = arith.constant 0 : index
    %126 = vector.load %arg8[%c0_85, %c0_86] : memref<1x128xf32, #tpu.memory_space<vmem>>, vector<1x128xf32>
    %127 = arith.addf %125, %126 : vector<1x128xf32>
    %c0_87 = arith.constant 0 : index
    %c0_88 = arith.constant 0 : index
    %128 = vector.load %arg13[%c0_87, %c0_88] : memref<32x128xf32, #tpu.memory_space<vmem>>, vector<32x128xf32>
    %cst_89 = arith.constant dense<0.000000e+00> : vector<1x128xf32>
    %129 = tpu.matmul %110, %128, %cst_89 {dimension_numbers = #tpu.dot_dimension_numbers<[1], [0], [0], [1], [0, 0, 1, 1], [], []>} : vector<1x32xf32>, vector<32x128xf32>, vector<1x128xf32> -> vector<1x128xf32>
    %130 = arith.mulf %129, %127 : vector<1x128xf32>
    %c0_90 = arith.constant 0 : index
    %c0_91 = arith.constant 0 : index
    %131 = vector.load %arg14[%c0_90, %c0_91] : memref<128x4xf32, #tpu.memory_space<vmem>>, vector<128x4xf32>
    %cst_92 = arith.constant dense<0.000000e+00> : vector<1x4xf32>
    %132 = tpu.matmul %130, %131, %cst_92 {dimension_numbers = #tpu.dot_dimension_numbers<[1], [0], [0], [1], [0, 0, 1, 1], [], []>} : vector<1x128xf32>, vector<128x4xf32>, vector<1x4xf32> -> vector<1x4xf32>
    %c0_93 = arith.constant 0 : index
    %c0_94 = arith.constant 0 : index
    %c0_95 = arith.constant 0 : index
    %133 = vector.load %arg15[%c0_93, %c0_94, %c0_95] : memref<1x1x4xf32, #tpu.memory_space<vmem>>, vector<1x1x4xf32>
    %134 = vector.shape_cast %133 : vector<1x1x4xf32> to vector<1x4xf32>
    %135 = vector.shape_cast %132 : vector<1x4xf32> to vector<1x1x4xf32>
    tpu.vector_store %arg15[%c0_93, %c0_94, %c0_95], %135 {strides = array<i32>} : memref<1x1x4xf32, #tpu.memory_space<vmem>>, vector<1x1x4xf32>,
    return
  }
  func.func @transform_0(%arg0: i32) -> (i32, i32, i32) {
    %c0_i32 = arith.constant 0 : i32
    %c0_i32_0 = arith.constant 0 : i32
    %c0_i32_1 = arith.constant 0 : i32
    return %arg0, %c0_i32, %c0_i32_0 : i32, i32, i32
  }
  func.func @transform_1(%arg0: i32) -> (i32, i32) {
    %c0_i32 = arith.constant 0 : i32
    %c0_i32_0 = arith.constant 0 : i32
    %c0_i32_1 = arith.constant 0 : i32
    return %c0_i32, %c0_i32_0 : i32, i32
  }
  func.func @transform_2(%arg0: i32) -> (i32, i32) {
    %c0_i32 = arith.constant 0 : i32
    %c0_i32_0 = arith.constant 0 : i32
    %c0_i32_1 = arith.constant 0 : i32
    return %c0_i32, %c0_i32_0 : i32, i32
  }
  func.func @transform_3(%arg0: i32) -> (i32, i32) {
    %c0_i32 = arith.constant 0 : i32
    %c0_i32_0 = arith.constant 0 : i32
    %c0_i32_1 = arith.constant 0 : i32
    return %c0_i32, %c0_i32_0 : i32, i32
  }
  func.func @transform_4(%arg0: i32) -> (i32, i32) {
    %c0_i32 = arith.constant 0 : i32
    %c0_i32_0 = arith.constant 0 : i32
    %c0_i32_1 = arith.constant 0 : i32
    return %c0_i32, %c0_i32_0 : i32, i32
  }
  func.func @transform_5(%arg0: i32) -> (i32, i32) {
    %c0_i32 = arith.constant 0 : i32
    %c0_i32_0 = arith.constant 0 : i32
    %c0_i32_1 = arith.constant 0 : i32
    return %c0_i32, %c0_i32_0 : i32, i32
  }
  func.func @transform_6(%arg0: i32) -> (i32, i32) {
    %c0_i32 = arith.constant 0 : i32
    %c0_i32_0 = arith.constant 0 : i32
    %c0_i32_1 = arith.constant 0 : i32
    return %c0_i32, %c0_i32_0 : i32, i32
  }
  func.func @transform_7(%arg0: i32) -> (i32, i32) {
    %c0_i32 = arith.constant 0 : i32
    %c0_i32_0 = arith.constant 0 : i32
    %c0_i32_1 = arith.constant 0 : i32
    return %c0_i32, %c0_i32_0 : i32, i32
  }
  func.func @transform_8(%arg0: i32) -> (i32, i32, i32) {
    %c0_i32 = arith.constant 0 : i32
    %c0_i32_0 = arith.constant 0 : i32
    %c0_i32_1 = arith.constant 0 : i32
    %c0_i32_2 = arith.constant 0 : i32
    return %c0_i32, %c0_i32_0, %c0_i32_1 : i32, i32, i32
  }
  func.func @transform_9(%arg0: i32) -> (i32, i32) {
    %c0_i32 = arith.constant 0 : i32
    %c0_i32_0 = arith.constant 0 : i32
    %c0_i32_1 = arith.constant 0 : i32
    return %c0_i32, %c0_i32_0 : i32, i32
  }
  func.func @transform_10(%arg0: i32) -> (i32, i32) {
    %c0_i32 = arith.constant 0 : i32
    %c0_i32_0 = arith.constant 0 : i32
    %c0_i32_1 = arith.constant 0 : i32
    return %c0_i32, %c0_i32_0 : i32, i32
  }
  func.func @transform_11(%arg0: i32) -> (i32, i32) {
    %c0_i32 = arith.constant 0 : i32
    %c0_i32_0 = arith.constant 0 : i32
    %c0_i32_1 = arith.constant 0 : i32
    return %c0_i32, %c0_i32_0 : i32, i32
  }
  func.func @transform_12(%arg0: i32) -> (i32, i32) {
    %c0_i32 = arith.constant 0 : i32
    %c0_i32_0 = arith.constant 0 : i32
    %c0_i32_1 = arith.constant 0 : i32
    return %c0_i32, %c0_i32_0 : i32, i32
  }
  func.func @transform_13(%arg0: i32) -> (i32, i32) {
    %c0_i32 = arith.constant 0 : i32
    %c0_i32_0 = arith.constant 0 : i32
    %c0_i32_1 = arith.constant 0 : i32
    return %c0_i32, %c0_i32_0 : i32, i32
  }
  func.func @transform_14(%arg0: i32) -> (i32, i32, i32) {
    %c0_i32 = arith.constant 0 : i32
    %c0_i32_0 = arith.constant 0 : i32
    %c0_i32_1 = arith.constant 0 : i32
    return %arg0, %c0_i32, %c0_i32_0 : i32, i32, i32
  }
}

</mosaic_0001>

<llo_original>
// kernel: forward.1
$region0: #{forward.1}
  #allocation0 [shape = 'u32[]', space=smem, size = 0x4, offset = 0x4, fixed_abs, tag = 'smem constant byte address 0x4 - core index']
  #allocation1 [shape = 'u32[144,128]{1,0:T(1,128)}', space=vmem, size = 0x12000, scoped, tag = 'internal scratch']
  %s0 = inlined_call_operand.vmem [shape: f32[2,3,290], index: 0, kind: input, shape index: {}]
  %s1 = inlined_call_operand.vmem [shape: f32[1,256], index: 1, kind: input, shape index: {}]
  %s2 = inlined_call_operand.vmem [shape: f32[256,32], index: 2, kind: input, shape index: {}]
  %s3 = inlined_call_operand.vmem [shape: f32[1,32], index: 3, kind: input, shape index: {}]
  %s4 = inlined_call_operand.vmem [shape: f32[32,32], index: 4, kind: input, shape index: {}]
  %s5 = inlined_call_operand.vmem [shape: f32[1,32], index: 5, kind: input, shape index: {}]
  %s6 = inlined_call_operand.vmem [shape: f32[32,128], index: 6, kind: input, shape index: {}]
  %s7 = inlined_call_operand.vmem [shape: f32[1,128], index: 7, kind: input, shape index: {}]
  %s8 = inlined_call_operand.vmem [shape: f32[9,8,3], index: 8, kind: input, shape index: {}]
  %s9 = inlined_call_operand.vmem [shape: f32[8,1], index: 9, kind: input, shape index: {}]
  %s10 = inlined_call_operand.vmem [shape: f32[8,32], index: 10, kind: input, shape index: {}]
  %s11 = inlined_call_operand.vmem [shape: f32[1,32], index: 11, kind: input, shape index: {}]
  %s12 = inlined_call_operand.vmem [shape: f32[32,128], index: 12, kind: input, shape index: {}]
  %s13 = inlined_call_operand.vmem [shape: f32[128,4], index: 13, kind: input, shape index: {}]
  %s14 = inlined_call_operand.hbm [shape: f32[2,1,4], index: 14, kind: output, shape index: {}]
  %s15 = sld [smem:[#allocation0]]
  $region89: #{forward.1} parent=0
    _
  %s17 = ssub.s32 1, %s15
  %s18 = scalar_select 0, %s17, %s15
  $region1: #{forward.1} parent=0
    #allocation2 [shape = 'u8[1024]{0}', space=vmem, size = 0x400, scoped, tag = 'output window, operand 0']
    #allocation3 [shape = 's32[2]{0}', space=sflag, size = 0x8, scoped, tag = 'scoped memory for forward.1']
    %19 = vsyncpa [#allocation3], 0
    %s20 = scalar_lea.sflag [#allocation3], 1
    %21 = vsyncpa %s20, 0
    loop: start=0, step=1, limit=4
    $region2: #{forward.1} parent=1 // loop_pre_header
      _
    $region3: #{forward.1} parent=1 // loop_header
      %s23 = sphi 0, %s27
      %p24 = scmp.ge.s32.totalorder %s23, 4
      %s33 = sphi 0, %s35
      %s36 = sphi 0, %s33
      %s37 = sphi 0, %s36
      %s53 = sphi 0, %s37
      %s57 = sphi 0, %s57
      %s59 = sphi 0, %s57
      %s60 = sphi 0, %s59
      %s74 = sphi 0, %s60
      %s78 = sphi 0, %s78
      %s80 = sphi 0, %s78
      %s81 = sphi 0, %s80
      %s95 = sphi 0, %s81
      %s99 = sphi 0, %s99
      %s101 = sphi 0, %s99
      %s102 = sphi 0, %s101
      %s116 = sphi 0, %s102
      %s120 = sphi 0, %s120
      %s122 = sphi 0, %s120
      %s123 = sphi 0, %s122
      %s137 = sphi 0, %s123
      %s141 = sphi 0, %s141
      %s143 = sphi 0, %s141
      %s144 = sphi 0, %s143
      %s158 = sphi 0, %s144
      %s162 = sphi 0, %s162
      %s164 = sphi 0, %s162
      %s165 = sphi 0, %s164
      %s179 = sphi 0, %s165
      %s183 = sphi 0, %s183
      %s185 = sphi 0, %s183
      %s186 = sphi 0, %s185
      %s200 = sphi 0, %s186
      %s204 = sphi 0, %s204
      %s206 = sphi 0, %s204
      %s207 = sphi 0, %s206
      %s221 = sphi 0, %s207
      %s225 = sphi 0, %s225
      %s227 = sphi 0, %s225
      %s228 = sphi 0, %s227
      %s242 = sphi 0, %s228
      %s246 = sphi 0, %s246
      %s248 = sphi 0, %s246
      %s249 = sphi 0, %s248
      %s263 = sphi 0, %s249
      %s267 = sphi 0, %s267
      %s269 = sphi 0, %s267
      %s270 = sphi 0, %s269
      %s284 = sphi 0, %s270
      %s288 = sphi 0, %s288
      %s290 = sphi 0, %s288
      %s291 = sphi 0, %s290
      %s305 = sphi 0, %s291
      %s309 = sphi 0, %s309
      %s311 = sphi 0, %s309
      %s312 = sphi 0, %s311
      %s326 = sphi 0, %s312
      %s332 = sphi 0, %s334
      %s335 = sphi 0, %s332
      %s336 = sphi 0, %s335
      %s352 = sphi 0, %s336
    $region4: #{forward.1} parent=1 // loop_header_branch
      %26 = sbr.rel (%p24) target = $region8
    $region5: #{forward.1} parent=1 // loop_body
      %s28 = ssub.s32 %s23, 1
      %s29 = ssub.s32 %s23, 2
      %s30 = sadd.s32 %s23, 1
      %s31 = ssub.s32 %s23, %s30
      %p32 = scmp.eq.s32.totalorder %s31, 0
      %s34 = sadd.s32 %s33, 1
      %s35 = scalar_select %p32, %s33, %s34
      %p38 = pneg %p32
      %p39 = scmp.eq.s32.totalorder %s23, 1
      %p40 = por %p38, %p39
      %p41 = scmp.ne.s32.totalorder %s33, %s36
      %p42 = scmp.eq.s32.totalorder %s23, 0
      %p43 = por %p41, %p42
      %p44 = scmp.ne.s32.totalorder %s33, %s36
      %p45 = scmp.eq.s32.totalorder %s28, 1
      %p46 = por %p44, %p45
      %p47 = scmp.ne.s32.totalorder %s36, %s37
      %p48 = scmp.eq.s32.totalorder %s28, 0
      %p49 = por %p47, %p48
      %p50 = scmp.ne.s32.totalorder %s36, %s37
      %p51 = scmp.eq.s32.totalorder %s29, 1
      %p52 = por %p50, %p51
      %p54 = scmp.ne.s32.totalorder %s37, %s53
      %p55 = scmp.eq.s32.totalorder %s29, 0
      %p56 = por %p54, %p55
      %s58 = sadd.s32 %s57, 1
      %p61 = scmp.eq.s32.totalorder %s23, 1
      %p62 = scmp.ne.s32.totalorder %s57, %s59
      %p63 = scmp.eq.s32.totalorder %s23, 0
      %p64 = por %p62, %p63
      %p65 = scmp.ne.s32.totalorder %s57, %s59
      %p66 = scmp.eq.s32.totalorder %s28, 1
      %p67 = por %p65, %p66
      %p68 = scmp.ne.s32.totalorder %s59, %s60
      %p69 = scmp.eq.s32.totalorder %s28, 0
      %p70 = por %p68, %p69
      %p71 = scmp.ne.s32.totalorder %s59, %s60
      %p72 = scmp.eq.s32.totalorder %s29, 1
      %p73 = por %p71, %p72
      %p75 = scmp.ne.s32.totalorder %s60, %s74
      %p76 = scmp.eq.s32.totalorder %s29, 0
      %p77 = por %p75, %p76
      %s79 = sadd.s32 %s78, 1
      %p82 = scmp.eq.s32.totalorder %s23, 1
      %p83 = scmp.ne.s32.totalorder %s78, %s80
      %p84 = scmp.eq.s32.totalorder %s23, 0
      %p85 = por %p83, %p84
      %p86 = scmp.ne.s32.totalorder %s78, %s80
      %p87 = scmp.eq.s32.totalorder %s28, 1
      %p88 = por %p86, %p87
      %p89 = scmp.ne.s32.totalorder %s80, %s81
      %p90 = scmp.eq.s32.totalorder %s28, 0
      %p91 = por %p89, %p90
      %p92 = scmp.ne.s32.totalorder %s80, %s81
      %p93 = scmp.eq.s32.totalorder %s29, 1
      %p94 = por %p92, %p93
      %p96 = scmp.ne.s32.totalorder %s81, %s95
      %p97 = scmp.eq.s32.totalorder %s29, 0
      %p98 = por %p96, %p97
      %s100 = sadd.s32 %s99, 1
      %p103 = scmp.eq.s32.totalorder %s23, 1
      %p104 = scmp.ne.s32.totalorder %s99, %s101
      %p105 = scmp.eq.s32.totalorder %s23, 0
      %p106 = por %p104, %p105
      %p107 = scmp.ne.s32.totalorder %s99, %s101
      %p108 = scmp.eq.s32.totalorder %s28, 1
      %p109 = por %p107, %p108
      %p110 = scmp.ne.s32.totalorder %s101, %s102
      %p111 = scmp.eq.s32.totalorder %s28, 0
      %p112 = por %p110, %p111
      %p113 = scmp.ne.s32.totalorder %s101, %s102
      %p114 = scmp.eq.s32.totalorder %s29, 1
      %p115 = por %p113, %p114
      %p117 = scmp.ne.s32.totalorder %s102, %s116
      %p118 = scmp.eq.s32.totalorder %s29, 0
      %p119 = por %p117, %p118
      %s121 = sadd.s32 %s120, 1
      %p124 = scmp.eq.s32.totalorder %s23, 1
      %p125 = scmp.ne.s32.totalorder %s120, %s122
      %p126 = scmp.eq.s32.totalorder %s23, 0
      %p127 = por %p125, %p126
      %p128 = scmp.ne.s32.totalorder %s120, %s122
      %p129 = scmp.eq.s32.totalorder %s28, 1
      %p130 = por %p128, %p129
      %p131 = scmp.ne.s32.totalorder %s122, %s123
      %p132 = scmp.eq.s32.totalorder %s28, 0
      %p133 = por %p131, %p132
      %p134 = scmp.ne.s32.totalorder %s122, %s123
      %p135 = scmp.eq.s32.totalorder %s29, 1
      %p136 = por %p134, %p135
      %p138 = scmp.ne.s32.totalorder %s123, %s137
      %p139 = scmp.eq.s32.totalorder %s29, 0
      %p140 = por %p138, %p139
      %s142 = sadd.s32 %s141, 1
      %p145 = scmp.eq.s32.totalorder %s23, 1
      %p146 = scmp.ne.s32.totalorder %s141, %s143
      %p147 = scmp.eq.s32.totalorder %s23, 0
      %p148 = por %p146, %p147
      %p149 = scmp.ne.s32.totalorder %s141, %s143
      %p150 = scmp.eq.s32.totalorder %s28, 1
      %p151 = por %p149, %p150
      %p152 = scmp.ne.s32.totalorder %s143, %s144
      %p153 = scmp.eq.s32.totalorder %s28, 0
      %p154 = por %p152, %p153
      %p155 = scmp.ne.s32.totalorder %s143, %s144
      %p156 = scmp.eq.s32.totalorder %s29, 1
      %p157 = por %p155, %p156
      %p159 = scmp.ne.s32.totalorder %s144, %s158
      %p160 = scmp.eq.s32.totalorder %s29, 0
      %p161 = por %p159, %p160
      %s163 = sadd.s32 %s162, 1
      %p166 = scmp.eq.s32.totalorder %s23, 1
      %p167 = scmp.ne.s32.totalorder %s162, %s164
      %p168 = scmp.eq.s32.totalorder %s23, 0
      %p169 = por %p167, %p168
      %p170 = scmp.ne.s32.totalorder %s162, %s164
      %p171 = scmp.eq.s32.totalorder %s28, 1
      %p172 = por %p170, %p171
      %p173 = scmp.ne.s32.totalorder %s164, %s165
      %p174 = scmp.eq.s32.totalorder %s28, 0
      %p175 = por %p173, %p174
      %p176 = scmp.ne.s32.totalorder %s164, %s165
      %p177 = scmp.eq.s32.totalorder %s29, 1
      %p178 = por %p176, %p177
      %p180 = scmp.ne.s32.totalorder %s165, %s179
      %p181 = scmp.eq.s32.totalorder %s29, 0
      %p182 = por %p180, %p181
      %s184 = sadd.s32 %s183, 1
      %p187 = scmp.eq.s32.totalorder %s23, 1
      %p188 = scmp.ne.s32.totalorder %s183, %s185
      %p189 = scmp.eq.s32.totalorder %s23, 0
      %p190 = por %p188, %p189
      %p191 = scmp.ne.s32.totalorder %s183, %s185
      %p192 = scmp.eq.s32.totalorder %s28, 1
      %p193 = por %p191, %p192
      %p194 = scmp.ne.s32.totalorder %s185, %s186
      %p195 = scmp.eq.s32.totalorder %s28, 0
      %p196 = por %p194, %p195
      %p197 = scmp.ne.s32.totalorder %s185, %s186
      %p198 = scmp.eq.s32.totalorder %s29, 1
      %p199 = por %p197, %p198
      %p201 = scmp.ne.s32.totalorder %s186, %s200
      %p202 = scmp.eq.s32.totalorder %s29, 0
      %p203 = por %p201, %p202
      %s205 = sadd.s32 %s204, 1
      %p208 = scmp.eq.s32.totalorder %s23, 1
      %p209 = scmp.ne.s32.totalorder %s204, %s206
      %p210 = scmp.eq.s32.totalorder %s23, 0
      %p211 = por %p209, %p210
      %p212 = scmp.ne.s32.totalorder %s204, %s206
      %p213 = scmp.eq.s32.totalorder %s28, 1
      %p214 = por %p212, %p213
      %p215 = scmp.ne.s32.totalorder %s206, %s207
      %p216 = scmp.eq.s32.totalorder %s28, 0
      %p217 = por %p215, %p216
      %p218 = scmp.ne.s32.totalorder %s206, %s207
      %p219 = scmp.eq.s32.totalorder %s29, 1
      %p220 = por %p218, %p219
      %p222 = scmp.ne.s32.totalorder %s207, %s221
      %p223 = scmp.eq.s32.totalorder %s29, 0
      %p224 = por %p222, %p223
      %s226 = sadd.s32 %s225, 1
      %p229 = scmp.eq.s32.totalorder %s23, 1
      %p230 = scmp.ne.s32.totalorder %s225, %s227
      %p231 = scmp.eq.s32.totalorder %s23, 0
      %p232 = por %p230, %p231
      %p233 = scmp.ne.s32.totalorder %s225, %s227
      %p234 = scmp.eq.s32.totalorder %s28, 1
      %p235 = por %p233, %p234
      %p236 = scmp.ne.s32.totalorder %s227, %s228
      %p237 = scmp.eq.s32.totalorder %s28, 0
      %p238 = por %p236, %p237
      %p239 = scmp.ne.s32.totalorder %s227, %s228
      %p240 = scmp.eq.s32.totalorder %s29, 1
      %p241 = por %p239, %p240
      %p243 = scmp.ne.s32.totalorder %s228, %s242
      %p244 = scmp.eq.s32.totalorder %s29, 0
      %p245 = por %p243, %p244
      %s247 = sadd.s32 %s246, 1
      %p250 = scmp.eq.s32.totalorder %s23, 1
      %p251 = scmp.ne.s32.totalorder %s246, %s248
      %p252 = scmp.eq.s32.totalorder %s23, 0
      %p253 = por %p251, %p252
      %p254 = scmp.ne.s32.totalorder %s246, %s248
      %p255 = scmp.eq.s32.totalorder %s28, 1
      %p256 = por %p254, %p255
      %p257 = scmp.ne.s32.totalorder %s248, %s249
      %p258 = scmp.eq.s32.totalorder %s28, 0
      %p259 = por %p257, %p258
      %p260 = scmp.ne.s32.totalorder %s248, %s249
      %p261 = scmp.eq.s32.totalorder %s29, 1
      %p262 = por %p260, %p261
      %p264 = scmp.ne.s32.totalorder %s249, %s263
      %p265 = scmp.eq.s32.totalorder %s29, 0
      %p266 = por %p264, %p265
      %s268 = sadd.s32 %s267, 1
      %p271 = scmp.eq.s32.totalorder %s23, 1
      %p272 = scmp.ne.s32.totalorder %s267, %s269
      %p273 = scmp.eq.s32.totalorder %s23, 0
      %p274 = por %p272, %p273
      %p275 = scmp.ne.s32.totalorder %s267, %s269
      %p276 = scmp.eq.s32.totalorder %s28, 1
      %p277 = por %p275, %p276
      %p278 = scmp.ne.s32.totalorder %s269, %s270
      %p279 = scmp.eq.s32.totalorder %s28, 0
      %p280 = por %p278, %p279
      %p281 = scmp.ne.s32.totalorder %s269, %s270
      %p282 = scmp.eq.s32.totalorder %s29, 1
      %p283 = por %p281, %p282
      %p285 = scmp.ne.s32.totalorder %s270, %s284
      %p286 = scmp.eq.s32.totalorder %s29, 0
      %p287 = por %p285, %p286
      %s289 = sadd.s32 %s288, 1
      %p292 = scmp.eq.s32.totalorder %s23, 1
      %p293 = scmp.ne.s32.totalorder %s288, %s290
      %p294 = scmp.eq.s32.totalorder %s23, 0
      %p295 = por %p293, %p294
      %p296 = scmp.ne.s32.totalorder %s288, %s290
      %p297 = scmp.eq.s32.totalorder %s28, 1
      %p298 = por %p296, %p297
      %p299 = scmp.ne.s32.totalorder %s290, %s291
      %p300 = scmp.eq.s32.totalorder %s28, 0
      %p301 = por %p299, %p300
      %p302 = scmp.ne.s32.totalorder %s290, %s291
      %p303 = scmp.eq.s32.totalorder %s29, 1
      %p304 = por %p302, %p303
      %p306 = scmp.ne.s32.totalorder %s291, %s305
      %p307 = scmp.eq.s32.totalorder %s29, 0
      %p308 = por %p306, %p307
      %s310 = sadd.s32 %s309, 1
      %p313 = scmp.eq.s32.totalorder %s23, 1
      %p314 = scmp.ne.s32.totalorder %s309, %s311
      %p315 = scmp.eq.s32.totalorder %s23, 0
      %p316 = por %p314, %p315
      %p317 = scmp.ne.s32.totalorder %s309, %s311
      %p318 = scmp.eq.s32.totalorder %s28, 1
      %p319 = por %p317, %p318
      %p320 = scmp.ne.s32.totalorder %s311, %s312
      %p321 = scmp.eq.s32.totalorder %s28, 0
      %p322 = por %p320, %p321
      %p323 = scmp.ne.s32.totalorder %s311, %s312
      %p324 = scmp.eq.s32.totalorder %s29, 1
      %p325 = por %p323, %p324
      %p327 = scmp.ne.s32.totalorder %s312, %s326
      %p328 = scmp.eq.s32.totalorder %s29, 0
      %p329 = por %p327, %p328
      %s330 = ssub.s32 %s23, %s30
      %p331 = scmp.eq.s32.totalorder %s330, 0
      %s333 = sadd.s32 %s332, 1
      %s334 = scalar_select %p331, %s332, %s333
      %p337 = pneg %p331
      %p338 = scmp.eq.s32.totalorder %s23, 1
      %p339 = por %p337, %p338
      %p340 = scmp.ne.s32.totalorder %s332, %s335
      %p341 = scmp.eq.s32.totalorder %s23, 0
      %p342 = por %p340, %p341
      %p343 = scmp.ne.s32.totalorder %s332, %s335
      %p344 = scmp.eq.s32.totalorder %s28, 1
      %p345 = por %p343, %p344
      %p346 = scmp.ne.s32.totalorder %s335, %s336
      %p347 = scmp.eq.s32.totalorder %s28, 0
      %p348 = por %p346, %p347
      %p349 = scmp.ne.s32.totalorder %s335, %s336
      %p350 = scmp.eq.s32.totalorder %s29, 1
      %p351 = por %p349, %p350
      %p353 = scmp.ne.s32.totalorder %s336, %s352
      %p354 = scmp.eq.s32.totalorder %s29, 0
      %p355 = por %p353, %p354
      %p356 = scmp.le.s32.totalorder 1, %s23
      %p357 = scmp.lt.s32.totalorder %s23, 3
      %p358 = pnand %p356, %p357
      %p359 = pneg %p358
      // Predicated region
      $region9: #{forward.1} parent=5 // pred_check
        _
      $region10: #{forward.1} parent=5 // pred_check_branch
        %361 = sbr.rel (%p358) target = $region12
      $region11: #{forward.1} parent=5 // pred_region
        %s362 = ssub.s32 %s23, 1
        // Predicated region
        $region13: #{forward.1} parent=11 // pred_check
          %p363 = pneg %p70
        $region14: #{forward.1} parent=11 // pred_check_branch
          %365 = sbr.rel (%p363) target = $region16
        $region15: #{forward.1} parent=11 // pred_region
          _
        $region16: #{forward.1} parent=11 // pred_fallthru
          _
        // Predicated region
        $region17: #{forward.1} parent=11 // pred_check
          %p366 = pneg %p91
        $region18: #{forward.1} parent=11 // pred_check_branch
          %368 = sbr.rel (%p366) target = $region20
        $region19: #{forward.1} parent=11 // pred_region
          _
        $region20: #{forward.1} parent=11 // pred_fallthru
          _
        // Predicated region
        $region21: #{forward.1} parent=11 // pred_check
          %p369 = pneg %p112
        $region22: #{forward.1} parent=11 // pred_check_branch
          %371 = sbr.rel (%p369) target = $region24
        $region23: #{forward.1} parent=11 // pred_region
          _
        $region24: #{forward.1} parent=11 // pred_fallthru
          _
        // Predicated region
        $region25: #{forward.1} parent=11 // pred_check
          %p372 = pneg %p133
        $region26: #{forward.1} parent=11 // pred_check_branch
          %374 = sbr.rel (%p372) target = $region28
        $region27: #{forward.1} parent=11 // pred_region
          _
        $region28: #{forward.1} parent=11 // pred_fallthru
          _
        // Predicated region
        $region29: #{forward.1} parent=11 // pred_check
          %p375 = pneg %p154
        $region30: #{forward.1} parent=11 // pred_check_branch
          %377 = sbr.rel (%p375) target = $region32
        $region31: #{forward.1} parent=11 // pred_region
          _
        $region32: #{forward.1} parent=11 // pred_fallthru
          _
        // Predicated region
        $region33: #{forward.1} parent=11 // pred_check
          %p378 = pneg %p175
        $region34: #{forward.1} parent=11 // pred_check_branch
          %380 = sbr.rel (%p378) target = $region36
        $region35: #{forward.1} parent=11 // pred_region
          _
        $region36: #{forward.1} parent=11 // pred_fallthru
          _
        // Predicated region
        $region37: #{forward.1} parent=11 // pred_check
          %p381 = pneg %p196
        $region38: #{forward.1} parent=11 // pred_check_branch
          %383 = sbr.rel (%p381) target = $region40
        $region39: #{forward.1} parent=11 // pred_region
          _
        $region40: #{forward.1} parent=11 // pred_fallthru
          _
        // Predicated region
        $region41: #{forward.1} parent=11 // pred_check
          %p384 = pneg %p217
        $region42: #{forward.1} parent=11 // pred_check_branch
          %386 = sbr.rel (%p384) target = $region44
        $region43: #{forward.1} parent=11 // pred_region
          _
        $region44: #{forward.1} parent=11 // pred_fallthru
          _
        // Predicated region
        $region45: #{forward.1} parent=11 // pred_check
          %p387 = pneg %p238
        $region46: #{forward.1} parent=11 // pred_check_branch
          %389 = sbr.rel (%p387) target = $region48
        $region47: #{forward.1} parent=11 // pred_region
          _
        $region48: #{forward.1} parent=11 // pred_fallthru
          _
        // Predicated region
        $region49: #{forward.1} parent=11 // pred_check
          %p390 = pneg %p259
        $region50: #{forward.1} parent=11 // pred_check_branch
          %392 = sbr.rel (%p390) target = $region52
        $region51: #{forward.1} parent=11 // pred_region
          _
        $region52: #{forward.1} parent=11 // pred_fallthru
          _
        // Predicated region
        $region53: #{forward.1} parent=11 // pred_check
          %p393 = pneg %p280
        $region54: #{forward.1} parent=11 // pred_check_branch
          %395 = sbr.rel (%p393) target = $region56
        $region55: #{forward.1} parent=11 // pred_region
          _
        $region56: #{forward.1} parent=11 // pred_fallthru
          _
        // Predicated region
        $region57: #{forward.1} parent=11 // pred_check
          %p396 = pneg %p301
        $region58: #{forward.1} parent=11 // pred_check_branch
          %398 = sbr.rel (%p396) target = $region60
        $region59: #{forward.1} parent=11 // pred_region
          _
        $region60: #{forward.1} parent=11 // pred_fallthru
          _
        // Predicated region
        $region61: #{forward.1} parent=11 // pred_check
          %p399 = pneg %p322
        $region62: #{forward.1} parent=11 // pred_check_branch
          %401 = sbr.rel (%p399) target = $region64
        $region63: #{forward.1} parent=11 // pred_region
          _
        $region64: #{forward.1} parent=11 // pred_fallthru
          _
      $region12: #{forward.1} parent=5 // pred_fallthru
        _
      %p402 = scmp.lt.s32.totalorder %s23, 2
      // Predicated region
      $region65: #{forward.1} parent=5 // pred_check
        %p403 = pneg %p402
      $region66: #{forward.1} parent=5 // pred_check_branch
        %405 = sbr.rel (%p403) target = $region68
      $region67: #{forward.1} parent=5 // pred_region
        // Predicated region
        $region69: #{forward.1} parent=67 // pred_check
          %p406 = pneg %p43
        $region70: #{forward.1} parent=67 // pred_check_branch
          %408 = sbr.rel (%p406) target = $region72
        $region71: #{forward.1} parent=67 // pred_region
          %p409 = scmp.lt.s32.totalorder %s23, 1
          %s410 = scalar_select %p409, %s23, 1
          %s411 = smul.addr %s410, 3
          %s412 = smul.addr %s411, 4
          %s413 = scalar_lea.vmem %s0, %s412
        $region72: #{forward.1} parent=67 // pred_fallthru
          _
      $region68: #{forward.1} parent=5 // pred_fallthru
        _
      %p414 = scmp.le.s32.totalorder 1, %s23
      %p415 = scmp.lt.s32.totalorder %s23, 3
      %p416 = pnand %p414, %p415
      %p417 = pneg %p416
      // Predicated region
      $region73: #{forward.1} parent=5 // pred_check
        _
      $region74: #{forward.1} parent=5 // pred_check_branch
        %419 = sbr.rel (%p416) target = $region76
      $region75: #{forward.1} parent=5 // pred_region
        %s420 = ssub.s32 %s23, 1
        %p421 = scmp.lt.s32.totalorder %s28, 1
        %s422 = scalar_select %p421, %s28, 1
        %s423 = smul.addr %s422, 3
        %s424 = smul.addr %s423, 4
        %s425 = scalar_lea.vmem %s0, %s424
        %p426 = pneg %p49
        %p427 = pneg %p46
        %p428 = pneg %p70
        %p429 = pneg %p67
        %p430 = pneg %p91
        %p431 = pneg %p88
        %p432 = pneg %p112
        %p433 = pneg %p109
        %p434 = pneg %p133
        %p435 = pneg %p130
        %p436 = pneg %p154
        %p437 = pneg %p151
        %p438 = pneg %p175
        %p439 = pneg %p172
        %p440 = pneg %p196
        %p441 = pneg %p193
        %p442 = pneg %p217
        %p443 = pneg %p214
        %p444 = pneg %p238
        %p445 = pneg %p235
        %p446 = pneg %p259
        %p447 = pneg %p256
        %p448 = pneg %p280
        %p449 = pneg %p277
        %p450 = pneg %p301
        %p451 = pneg %p298
        %p452 = pneg %p322
        %p453 = pneg %p319
        %p454 = pneg %p348
        %p455 = pneg %p345
        %s456 = sand.u32 %s335, 1
        %s457 = scalar_lea.sflag [#allocation3], %s456
        %s458 = sand.u32 %s335, 1
        %s459 = scalar_lea.vmem [#allocation2], %s458
        %p460 = scmp.lt.s32.totalorder %s28, 1
        %s461 = scalar_select %p460, %s28, 1
        %s462 = smul.addr %s461, 3
        %s463 = smul.addr %s462, 4
        %s464 = scalar_lea.vmem %s0, %s463
        %v465 = vlaneseq
        %v466 = vand.u32 %v465, 127
        %v467 = vadd.s32 %v466, 128
        %vm468 = vcmp.lt.s32.totalorder %v466, 0
        %v469 = vsub.s32 0, %v466
        %v470 = vsel %vm468, %v469, %v466
        %v471 = vshrl.u32 %v470, 4
        %v472 = vand.u32 %v470, 15
        %v473 = vsub.s32 0, %v472
        %v474 = vsel %vm468, %v473, %v472
        %vm475 = vcmp.lt.s32.totalorder %v467, 0
        %v476 = vsub.s32 0, %v467
        %v477 = vsel %vm475, %v476, %v467
        %v478 = vshrl.u32 %v477, 4
        %v479 = vand.u32 %v477, 15
        %v480 = vsub.s32 0, %v479
        %v481 = vsel %vm475, %v480, %v479
        %vm482 = vcmp.ne.s32.totalorder %v474, 0
        %vm483 = vcmp.ne.s32.totalorder %v481, 0
        %vm484 = vcmp.lt.s32.totalorder %v474, 0
        %vm485 = vcmp.lt.s32.totalorder %v481, 0
        %vm486 = vmand %vm484, %vm482
        %vm487 = vmand %vm485, %vm483
        %v488 = vadd.s32 %v474, 16
        %v489 = vadd.s32 %v481, 16
        %v490 = vsel %vm486, %v488, %v474
        %v491 = vsel %vm487, %v489, %v481
        %vm492 = vcmp.ge.s32.totalorder %v490, 1
        %vm493 = vcmp.ge.s32.totalorder %v491, 1
        %vm494 = vcmp.le.s32.totalorder %v490, 14
        %vm495 = vcmp.le.s32.totalorder %v491, 14
        %v496 = vld [vmem:[%s464] sm:$0x77]
        %v497 = vsel %vm492, 1, 0
        %v498 = vsel %vm493, 1, 0
        %vm499 = vcmp.eq.s32.totalorder %v497, 1
        %vm500 = vcmp.eq.s32.totalorder %v498, 1
        %v502 = vcombine.high %v496, %v496
        %v504 = vsel %vm499, %v496, 0.0
        %v505 = vsel %vm500, %v502, 0.0
        %v506 = vld [vmem:[%s8] sm:$0xff]
        %v507 = vld [vmem:[%s464 + $0x8] sm:$0x7]
        %s508 = scalar_lea.vmem %s8, 8
        %v509 = vld [vmem:[%s508] sm:$0xff]
        %511 = vrot.lane.b32.xlu0 %v496, 127
        %v512 = vpop.permute.xlu0 %511
        %513 = vrot.lane.b32.xlu0 %v502, 127
        %v514 = vpop.permute.xlu0 %513
        %515 = vrot.lane.b32.xlu0 %v507, 127
        %v516 = vpop.permute.xlu0 %515
        %vm517 = vcmask 1039360
        %v518 = vsel %vm517, %v512, %v514
        %v519 = vsel %vm517, %v514, %v516
        %vm520 = vcmask 23552
        %v522 = vsel %vm520, %v509, 0
        %vm524 = vcmask 1042432
        %v525 = vsel %vm524, %v518, 0
        %v527 = vsel %vm524, %v519, 0
        %529 = vmatprep.subr.mxu0 0.0
        %530 = vmatpush1.msra.mxu0 0.0
        %531 = vmatprep.subr.mxu0 0.0
        %532 = vmatpush1.msra.mxu0 0.0
        %533 = vmatprep.subr.mxu0 0.0
        %534 = vmatpush1.msra.mxu0 0.0
        %535 = vmatprep.subr.mxu0 0.0
        %536 = vmatpush1.msra.mxu0 0.0
        %537 = vmatprep.subr.mxu0 0.0
        %538 = vmatpush1.msra.mxu0 0.0
        %539 = vmatprep.subr.mxu0 0.0
        %540 = vmatpush1.msra.mxu0 0.0
        %541 = vmatprep.subr.mxu0 0.0
        %542 = vmatpush1.msra.mxu0 0.0
        %543 = vmatprep.subr.mxu0 0.0
        %544 = vmatpush1.msra.mxu0 0.0
        %545 = vmatprep.subr.mxu0 0.0
        %546 = vmatpush1.msra.mxu0 0.0
        %547 = vmatprep.subr.mxu0 0.0
        %548 = vmatpush1.msra.mxu0 0.0
        %549 = vmatprep.subr.mxu0 0.0
        %550 = vmatpush1.msra.mxu0 0.0
        %551 = vmatprep.subr.mxu0 0.0
        %552 = vmatpush1.msra.mxu0 0.0
        %553 = vmatprep.subr.mxu0 0.0
        %554 = vmatpush1.msra.mxu0 0.0
        %555 = vmatprep.subr.mxu0 0.0
        %556 = vmatpush1.msra.mxu0 0.0
        %557 = vmatprep.subr.mxu0 0.0
        %558 = vmatpush1.msra.mxu0 0.0
        %559 = vmatprep.subr.mxu0 %v527
        %560 = vmatpush1.msra.mxu0 %v525
        %561 = vmatprep.subr.mxu0 0.0
        %562 = vmatpush2.msra.mxu0 0.0
        %563 = vmatprep.subr.mxu0 0.0
        %564 = vmatpush2.msra.mxu0 0.0
        %565 = vmatprep.subr.mxu0 0.0
        %566 = vmatpush2.msra.mxu0 0.0
        %567 = vmatprep.subr.mxu0 0.0
        %568 = vmatpush2.msra.mxu0 0.0
        %569 = vmatprep.subr.mxu0 0.0
        %570 = vmatpush2.msra.mxu0 0.0
        %571 = vmatprep.subr.mxu0 0.0
        %572 = vmatpush2.msra.mxu0 0.0
        %573 = vmatprep.subr.mxu0 0.0
        %574 = vmatpush2.msra.mxu0 0.0
        %575 = vmatprep.subr.mxu0 0.0
        %576 = vmatpush2.msra.mxu0 0.0
        %577 = vmatprep.subr.mxu0 0.0
        %578 = vmatpush2.msra.mxu0 0.0
        %579 = vmatprep.subr.mxu0 0.0
        %580 = vmatpush2.msra.mxu0 0.0
        %581 = vmatprep.subr.mxu0 0.0
        %582 = vmatpush2.msra.mxu0 0.0
        %583 = vmatprep.subr.mxu0 0.0
        %584 = vmatpush2.msra.mxu0 0.0
        %585 = vmatprep.subr.mxu0 0.0
        %586 = vmatpush2.msra.mxu0 0.0
        %587 = vmatprep.subr.mxu0 0.0
        %588 = vmatpush2.msra.mxu0 0.0
        %589 = vmatprep.subr.mxu0 0.0
        %590 = vmatpush2.msra.mxu0 0.0
        %591 = vmatprep.subr.mxu0 0.0
        %592 = vmatpush2.msra.mxu0 0.0
        %593 = vmatprep.mubr.f32.mxu0 0.0
        %594 = vmatmul.mubr.f32.gmra.mxu0 %v522
        %v595 = vpop.f32.mrf.mxu0
        %v596 = vadd.f32 0.0, %v595
        %v597 = vpop.f32.mrf.mxu0
        %v598 = vadd.f32 0.0, %v597
        %599 = vdwg.mxu0
        %v601 = vsel %vm520, %v506, 0
        %v604 = vsel %vm524, %v504, 0
        %v607 = vsel %vm524, %v505, 0
        %609 = vmatprep.subr.mxu0 0.0
        %610 = vmatpush1.msra.mxu0 0.0
        %611 = vmatprep.subr.mxu0 0.0
        %612 = vmatpush1.msra.mxu0 0.0
        %613 = vmatprep.subr.mxu0 0.0
        %614 = vmatpush1.msra.mxu0 0.0
        %615 = vmatprep.subr.mxu0 0.0
        %616 = vmatpush1.msra.mxu0 0.0
        %617 = vmatprep.subr.mxu0 0.0
        %618 = vmatpush1.msra.mxu0 0.0
        %619 = vmatprep.subr.mxu0 0.0
        %620 = vmatpush1.msra.mxu0 0.0
        %621 = vmatprep.subr.mxu0 0.0
        %622 = vmatpush1.msra.mxu0 0.0
        %623 = vmatprep.subr.mxu0 0.0
        %624 = vmatpush1.msra.mxu0 0.0
        %625 = vmatprep.subr.mxu0 0.0
        %626 = vmatpush1.msra.mxu0 0.0
        %627 = vmatprep.subr.mxu0 0.0
        %628 = vmatpush1.msra.mxu0 0.0
        %629 = vmatprep.subr.mxu0 0.0
        %630 = vmatpush1.msra.mxu0 0.0
        %631 = vmatprep.subr.mxu0 0.0
        %632 = vmatpush1.msra.mxu0 0.0
        %633 = vmatprep.subr.mxu0 0.0
        %634 = vmatpush1.msra.mxu0 0.0
        %635 = vmatprep.subr.mxu0 0.0
        %636 = vmatpush1.msra.mxu0 0.0
        %637 = vmatprep.subr.mxu0 0.0
        %638 = vmatpush1.msra.mxu0 0.0
        %639 = vmatprep.subr.mxu0 %v607
        %640 = vmatpush1.msra.mxu0 %v604
        %641 = vmatprep.subr.mxu0 0.0
        %642 = vmatpush2.msra.mxu0 0.0
        %643 = vmatprep.subr.mxu0 0.0
        %644 = vmatpush2.msra.mxu0 0.0
        %645 = vmatprep.subr.mxu0 0.0
        %646 = vmatpush2.msra.mxu0 0.0
        %647 = vmatprep.subr.mxu0 0.0
        %648 = vmatpush2.msra.mxu0 0.0
        %649 = vmatprep.subr.mxu0 0.0
        %650 = vmatpush2.msra.mxu0 0.0
        %651 = vmatprep.subr.mxu0 0.0
        %652 = vmatpush2.msra.mxu0 0.0
        %653 = vmatprep.subr.mxu0 0.0
        %654 = vmatpush2.msra.mxu0 0.0
        %655 = vmatprep.subr.mxu0 0.0
        %656 = vmatpush2.msra.mxu0 0.0
        %657 = vmatprep.subr.mxu0 0.0
        %658 = vmatpush2.msra.mxu0 0.0
        %659 = vmatprep.subr.mxu0 0.0
        %660 = vmatpush2.msra.mxu0 0.0
        %661 = vmatprep.subr.mxu0 0.0
        %662 = vmatpush2.msra.mxu0 0.0
        %663 = vmatprep.subr.mxu0 0.0
        %664 = vmatpush2.msra.mxu0 0.0
        %665 = vmatprep.subr.mxu0 0.0
        %666 = vmatpush2.msra.mxu0 0.0
        %667 = vmatprep.subr.mxu0 0.0
        %668 = vmatpush2.msra.mxu0 0.0
        %669 = vmatprep.subr.mxu0 0.0
        %670 = vmatpush2.msra.mxu0 0.0
        %671 = vmatprep.subr.mxu0 0.0
        %672 = vmatpush2.msra.mxu0 0.0
        %673 = vmatprep.mubr.f32.mxu0 0.0
        %674 = vmatmul.mubr.f32.gmra.mxu0 %v601
        %v675 = vpop.f32.mrf.mxu0
        %v676 = vadd.f32 %v596, %v675
        %v677 = vpop.f32.mrf.mxu0
        %v678 = vadd.f32 %v598, %v677
        %679 = vdwg.mxu0
        %v680 = vld [vmem:[%s464] sm:$0x77]
        %v681 = vld [vmem:[%s464 + $0x8] sm:$0x7]
        %v682 = vsel %vm494, 1, 0
        %v683 = vsel %vm495, 1, 0
        %vm684 = vcmp.eq.s32.totalorder %v682, 1
        %vm685 = vcmp.eq.s32.totalorder %v683, 1
        %v688 = vcombine.high %v680, %v680
        %689 = vrot.lane.b32.xlu0 %v680, 126
        %v690 = vpop.permute.xlu0 %689
        %691 = vrot.lane.b32.xlu0 %v688, 126
        %v692 = vpop.permute.xlu0 %691
        %693 = vrot.lane.b32.xlu0 %v681, 126
        %v694 = vpop.permute.xlu0 %693
        %vm695 = vcmask 1031168
        %v696 = vsel %vm695, %v690, %v692
        %v697 = vsel %vm695, %v692, %v694
        %v700 = vsel %vm684, %v696, 0.0
        %v701 = vsel %vm685, %v697, 0.0
        %s702 = scalar_lea.vmem %s8, 16
        %v703 = vld [vmem:[%s702] sm:$0xff]
        %v705 = vsel %vm520, %v703, 0
        %v708 = vsel %vm524, %v700, 0
        %v711 = vsel %vm524, %v701, 0
        %713 = vmatprep.subr.mxu0 0.0
        %714 = vmatpush1.msra.mxu0 0.0
        %715 = vmatprep.subr.mxu0 0.0
        %716 = vmatpush1.msra.mxu0 0.0
        %717 = vmatprep.subr.mxu0 0.0
        %718 = vmatpush1.msra.mxu0 0.0
        %719 = vmatprep.subr.mxu0 0.0
        %720 = vmatpush1.msra.mxu0 0.0
        %721 = vmatprep.subr.mxu0 0.0
        %722 = vmatpush1.msra.mxu0 0.0
        %723 = vmatprep.subr.mxu0 0.0
        %724 = vmatpush1.msra.mxu0 0.0
        %725 = vmatprep.subr.mxu0 0.0
        %726 = vmatpush1.msra.mxu0 0.0
        %727 = vmatprep.subr.mxu0 0.0
        %728 = vmatpush1.msra.mxu0 0.0
        %729 = vmatprep.subr.mxu0 0.0
        %730 = vmatpush1.msra.mxu0 0.0
        %731 = vmatprep.subr.mxu0 0.0
        %732 = vmatpush1.msra.mxu0 0.0
        %733 = vmatprep.subr.mxu0 0.0
        %734 = vmatpush1.msra.mxu0 0.0
        %735 = vmatprep.subr.mxu0 0.0
        %736 = vmatpush1.msra.mxu0 0.0
        %737 = vmatprep.subr.mxu0 0.0
        %738 = vmatpush1.msra.mxu0 0.0
        %739 = vmatprep.subr.mxu0 0.0
        %740 = vmatpush1.msra.mxu0 0.0
        %741 = vmatprep.subr.mxu0 0.0
        %742 = vmatpush1.msra.mxu0 0.0
        %743 = vmatprep.subr.mxu0 %v711
        %744 = vmatpush1.msra.mxu0 %v708
        %745 = vmatprep.subr.mxu0 0.0
        %746 = vmatpush2.msra.mxu0 0.0
        %747 = vmatprep.subr.mxu0 0.0
        %748 = vmatpush2.msra.mxu0 0.0
        %749 = vmatprep.subr.mxu0 0.0
        %750 = vmatpush2.msra.mxu0 0.0
        %751 = vmatprep.subr.mxu0 0.0
        %752 = vmatpush2.msra.mxu0 0.0
        %753 = vmatprep.subr.mxu0 0.0
        %754 = vmatpush2.msra.mxu0 0.0
        %755 = vmatprep.subr.mxu0 0.0
        %756 = vmatpush2.msra.mxu0 0.0
        %757 = vmatprep.subr.mxu0 0.0
        %758 = vmatpush2.msra.mxu0 0.0
        %759 = vmatprep.subr.mxu0 0.0
        %760 = vmatpush2.msra.mxu0 0.0
        %761 = vmatprep.subr.mxu0 0.0
        %762 = vmatpush2.msra.mxu0 0.0
        %763 = vmatprep.subr.mxu0 0.0
        %764 = vmatpush2.msra.mxu0 0.0
        %765 = vmatprep.subr.mxu0 0.0
        %766 = vmatpush2.msra.mxu0 0.0
        %767 = vmatprep.subr.mxu0 0.0
        %768 = vmatpush2.msra.mxu0 0.0
        %769 = vmatprep.subr.mxu0 0.0
        %770 = vmatpush2.msra.mxu0 0.0
        %771 = vmatprep.subr.mxu0 0.0
        %772 = vmatpush2.msra.mxu0 0.0
        %773 = vmatprep.subr.mxu0 0.0
        %774 = vmatpush2.msra.mxu0 0.0
        %775 = vmatprep.subr.mxu0 0.0
        %776 = vmatpush2.msra.mxu0 0.0
        %777 = vmatprep.mubr.f32.mxu0 0.0
        %778 = vmatmul.mubr.f32.gmra.mxu0 %v705
        %v779 = vpop.f32.mrf.mxu0
        %v780 = vadd.f32 0.0, %v779
        %v781 = vpop.f32.mrf.mxu0
        %v782 = vadd.f32 0.0, %v781
        %783 = vdwg.mxu0
        %v784 = vadd.f32 %v676, %v780
        %v785 = vadd.f32 %v678, %v782
        %v786 = vld [vmem:[%s464] sm:$0x77]
        %v787 = vld [vmem:[%s464 + $0x8] sm:$0x7]
        %v790 = vcombine.high %v786, %v786
        %791 = vrot.lane.b32.xlu0 %v786, 112
        %v792 = vpop.permute.xlu0 %791
        %793 = vrot.lane.b32.xlu0 %v790, 112
        %v794 = vpop.permute.xlu0 %793
        %795 = vrot.lane.b32.xlu0 %v787, 112
        %v796 = vpop.permute.xlu0 %795
        %vm797 = vcmask 916480
        %v798 = vsel %vm797, %v792, %v794
        %v799 = vsel %vm797, %v794, %v796
        %v802 = vsel %vm499, %v798, 0.0
        %v803 = vsel %vm500, %v799, 0.0
        %s804 = scalar_lea.vmem %s8, 24
        %v805 = vld [vmem:[%s804] sm:$0xff]
        %v807 = vsel %vm520, %v805, 0
        %v810 = vsel %vm524, %v802, 0
        %v813 = vsel %vm524, %v803, 0
        %815 = vmatprep.subr.mxu0 0.0
        %816 = vmatpush1.msra.mxu0 0.0
        %817 = vmatprep.subr.mxu0 0.0
        %818 = vmatpush1.msra.mxu0 0.0
        %819 = vmatprep.subr.mxu0 0.0
        %820 = vmatpush1.msra.mxu0 0.0
        %821 = vmatprep.subr.mxu0 0.0
        %822 = vmatpush1.msra.mxu0 0.0
        %823 = vmatprep.subr.mxu0 0.0
        %824 = vmatpush1.msra.mxu0 0.0
        %825 = vmatprep.subr.mxu0 0.0
        %826 = vmatpush1.msra.mxu0 0.0
        %827 = vmatprep.subr.mxu0 0.0
        %828 = vmatpush1.msra.mxu0 0.0
        %829 = vmatprep.subr.mxu0 0.0
        %830 = vmatpush1.msra.mxu0 0.0
        %831 = vmatprep.subr.mxu0 0.0
        %832 = vmatpush1.msra.mxu0 0.0
        %833 = vmatprep.subr.mxu0 0.0
        %834 = vmatpush1.msra.mxu0 0.0
        %835 = vmatprep.subr.mxu0 0.0
        %836 = vmatpush1.msra.mxu0 0.0
        %837 = vmatprep.subr.mxu0 0.0
        %838 = vmatpush1.msra.mxu0 0.0
        %839 = vmatprep.subr.mxu0 0.0
        %840 = vmatpush1.msra.mxu0 0.0
        %841 = vmatprep.subr.mxu0 0.0
        %842 = vmatpush1.msra.mxu0 0.0
        %843 = vmatprep.subr.mxu0 0.0
        %844 = vmatpush1.msra.mxu0 0.0
        %845 = vmatprep.subr.mxu0 %v813
        %846 = vmatpush1.msra.mxu0 %v810
        %847 = vmatprep.subr.mxu0 0.0
        %848 = vmatpush2.msra.mxu0 0.0
        %849 = vmatprep.subr.mxu0 0.0
        %850 = vmatpush2.msra.mxu0 0.0
        %851 = vmatprep.subr.mxu0 0.0
        %852 = vmatpush2.msra.mxu0 0.0
        %853 = vmatprep.subr.mxu0 0.0
        %854 = vmatpush2.msra.mxu0 0.0
        %855 = vmatprep.subr.mxu0 0.0
        %856 = vmatpush2.msra.mxu0 0.0
        %857 = vmatprep.subr.mxu0 0.0
        %858 = vmatpush2.msra.mxu0 0.0
        %859 = vmatprep.subr.mxu0 0.0
        %860 = vmatpush2.msra.mxu0 0.0
        %861 = vmatprep.subr.mxu0 0.0
        %862 = vmatpush2.msra.mxu0 0.0
        %863 = vmatprep.subr.mxu0 0.0
        %864 = vmatpush2.msra.mxu0 0.0
        %865 = vmatprep.subr.mxu0 0.0
        %866 = vmatpush2.msra.mxu0 0.0
        %867 = vmatprep.subr.mxu0 0.0
        %868 = vmatpush2.msra.mxu0 0.0
        %869 = vmatprep.subr.mxu0 0.0
        %870 = vmatpush2.msra.mxu0 0.0
        %871 = vmatprep.subr.mxu0 0.0
        %872 = vmatpush2.msra.mxu0 0.0
        %873 = vmatprep.subr.mxu0 0.0
        %874 = vmatpush2.msra.mxu0 0.0
        %875 = vmatprep.subr.mxu0 0.0
        %876 = vmatpush2.msra.mxu0 0.0
        %877 = vmatprep.subr.mxu0 0.0
        %878 = vmatpush2.msra.mxu0 0.0
        %879 = vmatprep.mubr.f32.mxu0 0.0
        %880 = vmatmul.mubr.f32.gmra.mxu0 %v807
        %v881 = vpop.f32.mrf.mxu0
        %v882 = vadd.f32 0.0, %v881
        %v883 = vpop.f32.mrf.mxu0
        %v884 = vadd.f32 0.0, %v883
        %885 = vdwg.mxu0
        %v886 = vadd.f32 %v784, %v882
        %v887 = vadd.f32 %v785, %v884
        %v888 = vld [vmem:[%s464] sm:$0x77]
        %v889 = vld [vmem:[%s464 + $0x8] sm:$0x7]
        %s890 = scalar_lea.vmem %s8, 32
        %v891 = vld [vmem:[%s890] sm:$0xff]
        %v894 = vcombine.high %v888, %v888
        %895 = vrot.lane.b32.xlu0 %v888, 111
        %v896 = vpop.permute.xlu0 %895
        %897 = vrot.lane.b32.xlu0 %v894, 111
        %v898 = vpop.permute.xlu0 %897
        %899 = vrot.lane.b32.xlu0 %v889, 111
        %v900 = vpop.permute.xlu0 %899
        %vm901 = vcmask 908288
        %v902 = vsel %vm901, %v896, %v898
        %v903 = vsel %vm901, %v898, %v900
        %v905 = vsel %vm520, %v891, 0
        %v907 = vsel %vm524, %v902, 0
        %v909 = vsel %vm524, %v903, 0
        %911 = vmatprep.subr.mxu0 0.0
        %912 = vmatpush1.msra.mxu0 0.0
        %913 = vmatprep.subr.mxu0 0.0
        %914 = vmatpush1.msra.mxu0 0.0
        %915 = vmatprep.subr.mxu0 0.0
        %916 = vmatpush1.msra.mxu0 0.0
        %917 = vmatprep.subr.mxu0 0.0
        %918 = vmatpush1.msra.mxu0 0.0
        %919 = vmatprep.subr.mxu0 0.0
        %920 = vmatpush1.msra.mxu0 0.0
        %921 = vmatprep.subr.mxu0 0.0
        %922 = vmatpush1.msra.mxu0 0.0
        %923 = vmatprep.subr.mxu0 0.0
        %924 = vmatpush1.msra.mxu0 0.0
        %925 = vmatprep.subr.mxu0 0.0
        %926 = vmatpush1.msra.mxu0 0.0
        %927 = vmatprep.subr.mxu0 0.0
        %928 = vmatpush1.msra.mxu0 0.0
        %929 = vmatprep.subr.mxu0 0.0
        %930 = vmatpush1.msra.mxu0 0.0
        %931 = vmatprep.subr.mxu0 0.0
        %932 = vmatpush1.msra.mxu0 0.0
        %933 = vmatprep.subr.mxu0 0.0
        %934 = vmatpush1.msra.mxu0 0.0
        %935 = vmatprep.subr.mxu0 0.0
        %936 = vmatpush1.msra.mxu0 0.0
        %937 = vmatprep.subr.mxu0 0.0
        %938 = vmatpush1.msra.mxu0 0.0
        %939 = vmatprep.subr.mxu0 0.0
        %940 = vmatpush1.msra.mxu0 0.0
        %941 = vmatprep.subr.mxu0 %v909
        %942 = vmatpush1.msra.mxu0 %v907
        %943 = vmatprep.subr.mxu0 0.0
        %944 = vmatpush2.msra.mxu0 0.0
        %945 = vmatprep.subr.mxu0 0.0
        %946 = vmatpush2.msra.mxu0 0.0
        %947 = vmatprep.subr.mxu0 0.0
        %948 = vmatpush2.msra.mxu0 0.0
        %949 = vmatprep.subr.mxu0 0.0
        %950 = vmatpush2.msra.mxu0 0.0
        %951 = vmatprep.subr.mxu0 0.0
        %952 = vmatpush2.msra.mxu0 0.0
        %953 = vmatprep.subr.mxu0 0.0
        %954 = vmatpush2.msra.mxu0 0.0
        %955 = vmatprep.subr.mxu0 0.0
        %956 = vmatpush2.msra.mxu0 0.0
        %957 = vmatprep.subr.mxu0 0.0
        %958 = vmatpush2.msra.mxu0 0.0
        %959 = vmatprep.subr.mxu0 0.0
        %960 = vmatpush2.msra.mxu0 0.0
        %961 = vmatprep.subr.mxu0 0.0
        %962 = vmatpush2.msra.mxu0 0.0
        %963 = vmatprep.subr.mxu0 0.0
        %964 = vmatpush2.msra.mxu0 0.0
        %965 = vmatprep.subr.mxu0 0.0
        %966 = vmatpush2.msra.mxu0 0.0
        %967 = vmatprep.subr.mxu0 0.0
        %968 = vmatpush2.msra.mxu0 0.0
        %969 = vmatprep.subr.mxu0 0.0
        %970 = vmatpush2.msra.mxu0 0.0
        %971 = vmatprep.subr.mxu0 0.0
        %972 = vmatpush2.msra.mxu0 0.0
        %973 = vmatprep.subr.mxu0 0.0
        %974 = vmatpush2.msra.mxu0 0.0
        %975 = vmatprep.mubr.f32.mxu0 0.0
        %976 = vmatmul.mubr.f32.gmra.mxu0 %v905
        %v977 = vpop.f32.mrf.mxu0
        %v978 = vadd.f32 0.0, %v977
        %v979 = vpop.f32.mrf.mxu0
        %v980 = vadd.f32 0.0, %v979
        %981 = vdwg.mxu0
        %v982 = vadd.f32 %v886, %v978
        %v983 = vadd.f32 %v887, %v980
        %v984 = vld [vmem:[%s464] sm:$0x77]
        %v985 = vld [vmem:[%s464 + $0x8] sm:$0x7]
        %v988 = vcombine.high %v984, %v984
        %989 = vrot.lane.b32.xlu0 %v984, 110
        %v990 = vpop.permute.xlu0 %989
        %991 = vrot.lane.b32.xlu0 %v988, 110
        %v992 = vpop.permute.xlu0 %991
        %993 = vrot.lane.b32.xlu0 %v985, 110
        %v994 = vpop.permute.xlu0 %993
        %vm995 = vcmask 900096
        %v996 = vsel %vm995, %v990, %v992
        %v997 = vsel %vm995, %v992, %v994
        %v1000 = vsel %vm684, %v996, 0.0
        %v1001 = vsel %vm685, %v997, 0.0
        %s1002 = scalar_lea.vmem %s8, 40
        %v1003 = vld [vmem:[%s1002] sm:$0xff]
        %v1005 = vsel %vm520, %v1003, 0
        %v1008 = vsel %vm524, %v1000, 0
        %v1011 = vsel %vm524, %v1001, 0
        %1013 = vmatprep.subr.mxu0 0.0
        %1014 = vmatpush1.msra.mxu0 0.0
        %1015 = vmatprep.subr.mxu0 0.0
        %1016 = vmatpush1.msra.mxu0 0.0
        %1017 = vmatprep.subr.mxu0 0.0
        %1018 = vmatpush1.msra.mxu0 0.0
        %1019 = vmatprep.subr.mxu0 0.0
        %1020 = vmatpush1.msra.mxu0 0.0
        %1021 = vmatprep.subr.mxu0 0.0
        %1022 = vmatpush1.msra.mxu0 0.0
        %1023 = vmatprep.subr.mxu0 0.0
        %1024 = vmatpush1.msra.mxu0 0.0
        %1025 = vmatprep.subr.mxu0 0.0
        %1026 = vmatpush1.msra.mxu0 0.0
        %1027 = vmatprep.subr.mxu0 0.0
        %1028 = vmatpush1.msra.mxu0 0.0
        %1029 = vmatprep.subr.mxu0 0.0
        %1030 = vmatpush1.msra.mxu0 0.0
        %1031 = vmatprep.subr.mxu0 0.0
        %1032 = vmatpush1.msra.mxu0 0.0
        %1033 = vmatprep.subr.mxu0 0.0
        %1034 = vmatpush1.msra.mxu0 0.0
        %1035 = vmatprep.subr.mxu0 0.0
        %1036 = vmatpush1.msra.mxu0 0.0
        %1037 = vmatprep.subr.mxu0 0.0
        %1038 = vmatpush1.msra.mxu0 0.0
        %1039 = vmatprep.subr.mxu0 0.0
        %1040 = vmatpush1.msra.mxu0 0.0
        %1041 = vmatprep.subr.mxu0 0.0
        %1042 = vmatpush1.msra.mxu0 0.0
        %1043 = vmatprep.subr.mxu0 %v1011
        %1044 = vmatpush1.msra.mxu0 %v1008
        %1045 = vmatprep.subr.mxu0 0.0
        %1046 = vmatpush2.msra.mxu0 0.0
        %1047 = vmatprep.subr.mxu0 0.0
        %1048 = vmatpush2.msra.mxu0 0.0
        %1049 = vmatprep.subr.mxu0 0.0
        %1050 = vmatpush2.msra.mxu0 0.0
        %1051 = vmatprep.subr.mxu0 0.0
        %1052 = vmatpush2.msra.mxu0 0.0
        %1053 = vmatprep.subr.mxu0 0.0
        %1054 = vmatpush2.msra.mxu0 0.0
        %1055 = vmatprep.subr.mxu0 0.0
        %1056 = vmatpush2.msra.mxu0 0.0
        %1057 = vmatprep.subr.mxu0 0.0
        %1058 = vmatpush2.msra.mxu0 0.0
        %1059 = vmatprep.subr.mxu0 0.0
        %1060 = vmatpush2.msra.mxu0 0.0
        %1061 = vmatprep.subr.mxu0 0.0
        %1062 = vmatpush2.msra.mxu0 0.0
        %1063 = vmatprep.subr.mxu0 0.0
        %1064 = vmatpush2.msra.mxu0 0.0
        %1065 = vmatprep.subr.mxu0 0.0
        %1066 = vmatpush2.msra.mxu0 0.0
        %1067 = vmatprep.subr.mxu0 0.0
        %1068 = vmatpush2.msra.mxu0 0.0
        %1069 = vmatprep.subr.mxu0 0.0
        %1070 = vmatpush2.msra.mxu0 0.0
        %1071 = vmatprep.subr.mxu0 0.0
        %1072 = vmatpush2.msra.mxu0 0.0
        %1073 = vmatprep.subr.mxu0 0.0
        %1074 = vmatpush2.msra.mxu0 0.0
        %1075 = vmatprep.subr.mxu0 0.0
        %1076 = vmatpush2.msra.mxu0 0.0
        %1077 = vmatprep.mubr.f32.mxu0 0.0
        %1078 = vmatmul.mubr.f32.gmra.mxu0 %v1005
        %v1079 = vpop.f32.mrf.mxu0
        %v1080 = vadd.f32 0.0, %v1079
        %v1081 = vpop.f32.mrf.mxu0
        %v1082 = vadd.f32 0.0, %v1081
        %1083 = vdwg.mxu0
        %v1084 = vadd.f32 %v982, %v1080
        %v1085 = vadd.f32 %v983, %v1082
        %v1086 = vld [vmem:[%s464] sm:$0x77]
        %v1087 = vld [vmem:[%s464 + $0x8] sm:$0x7]
        %v1090 = vcombine.high %v1086, %v1086
        %1091 = vrot.lane.b32.xlu0 %v1086, 96
        %v1092 = vpop.permute.xlu0 %1091
        %1093 = vrot.lane.b32.xlu0 %v1090, 96
        %v1094 = vpop.permute.xlu0 %1093
        %1095 = vrot.lane.b32.xlu0 %v1087, 96
        %v1096 = vpop.permute.xlu0 %1095
        %vm1097 = vcmask 785408
        %v1098 = vsel %vm1097, %v1092, %v1094
        %v1099 = vsel %vm1097, %v1094, %v1096
        %v1102 = vsel %vm499, %v1098, 0.0
        %v1103 = vsel %vm500, %v1099, 0.0
        %s1104 = scalar_lea.vmem %s8, 48
        %v1105 = vld [vmem:[%s1104] sm:$0xff]
        %v1107 = vsel %vm520, %v1105, 0
        %v1110 = vsel %vm524, %v1102, 0
        %v1113 = vsel %vm524, %v1103, 0
        %1115 = vmatprep.subr.mxu0 0.0
        %1116 = vmatpush1.msra.mxu0 0.0
        %1117 = vmatprep.subr.mxu0 0.0
        %1118 = vmatpush1.msra.mxu0 0.0
        %1119 = vmatprep.subr.mxu0 0.0
        %1120 = vmatpush1.msra.mxu0 0.0
        %1121 = vmatprep.subr.mxu0 0.0
        %1122 = vmatpush1.msra.mxu0 0.0
        %1123 = vmatprep.subr.mxu0 0.0
        %1124 = vmatpush1.msra.mxu0 0.0
        %1125 = vmatprep.subr.mxu0 0.0
        %1126 = vmatpush1.msra.mxu0 0.0
        %1127 = vmatprep.subr.mxu0 0.0
        %1128 = vmatpush1.msra.mxu0 0.0
        %1129 = vmatprep.subr.mxu0 0.0
        %1130 = vmatpush1.msra.mxu0 0.0
        %1131 = vmatprep.subr.mxu0 0.0
        %1132 = vmatpush1.msra.mxu0 0.0
        %1133 = vmatprep.subr.mxu0 0.0
        %1134 = vmatpush1.msra.mxu0 0.0
        %1135 = vmatprep.subr.mxu0 0.0
        %1136 = vmatpush1.msra.mxu0 0.0
        %1137 = vmatprep.subr.mxu0 0.0
        %1138 = vmatpush1.msra.mxu0 0.0
        %1139 = vmatprep.subr.mxu0 0.0
        %1140 = vmatpush1.msra.mxu0 0.0
        %1141 = vmatprep.subr.mxu0 0.0
        %1142 = vmatpush1.msra.mxu0 0.0
        %1143 = vmatprep.subr.mxu0 0.0
        %1144 = vmatpush1.msra.mxu0 0.0
        %1145 = vmatprep.subr.mxu0 %v1113
        %1146 = vmatpush1.msra.mxu0 %v1110
        %1147 = vmatprep.subr.mxu0 0.0
        %1148 = vmatpush2.msra.mxu0 0.0
        %1149 = vmatprep.subr.mxu0 0.0
        %1150 = vmatpush2.msra.mxu0 0.0
        %1151 = vmatprep.subr.mxu0 0.0
        %1152 = vmatpush2.msra.mxu0 0.0
        %1153 = vmatprep.subr.mxu0 0.0
        %1154 = vmatpush2.msra.mxu0 0.0
        %1155 = vmatprep.subr.mxu0 0.0
        %1156 = vmatpush2.msra.mxu0 0.0
        %1157 = vmatprep.subr.mxu0 0.0
        %1158 = vmatpush2.msra.mxu0 0.0
        %1159 = vmatprep.subr.mxu0 0.0
        %1160 = vmatpush2.msra.mxu0 0.0
        %1161 = vmatprep.subr.mxu0 0.0
        %1162 = vmatpush2.msra.mxu0 0.0
        %1163 = vmatprep.subr.mxu0 0.0
        %1164 = vmatpush2.msra.mxu0 0.0
        %1165 = vmatprep.subr.mxu0 0.0
        %1166 = vmatpush2.msra.mxu0 0.0
        %1167 = vmatprep.subr.mxu0 0.0
        %1168 = vmatpush2.msra.mxu0 0.0
        %1169 = vmatprep.subr.mxu0 0.0
        %1170 = vmatpush2.msra.mxu0 0.0
        %1171 = vmatprep.subr.mxu0 0.0
        %1172 = vmatpush2.msra.mxu0 0.0
        %1173 = vmatprep.subr.mxu0 0.0
        %1174 = vmatpush2.msra.mxu0 0.0
        %1175 = vmatprep.subr.mxu0 0.0
        %1176 = vmatpush2.msra.mxu0 0.0
        %1177 = vmatprep.subr.mxu0 0.0
        %1178 = vmatpush2.msra.mxu0 0.0
        %1179 = vmatprep.mubr.f32.mxu0 0.0
        %1180 = vmatmul.mubr.f32.gmra.mxu0 %v1107
        %v1181 = vpop.f32.mrf.mxu0
        %v1182 = vadd.f32 0.0, %v1181
        %v1183 = vpop.f32.mrf.mxu0
        %v1184 = vadd.f32 0.0, %v1183
        %1185 = vdwg.mxu0
        %v1186 = vadd.f32 %v1084, %v1182
        %v1187 = vadd.f32 %v1085, %v1184
        %v1188 = vld [vmem:[%s464] sm:$0x77]
        %v1189 = vld [vmem:[%s464 + $0x8] sm:$0x7]
        %s1190 = scalar_lea.vmem %s8, 56
        %v1191 = vld [vmem:[%s1190] sm:$0xff]
        %v1194 = vcombine.high %v1188, %v1188
        %1195 = vrot.lane.b32.xlu0 %v1188, 95
        %v1196 = vpop.permute.xlu0 %1195
        %1197 = vrot.lane.b32.xlu0 %v1194, 95
        %v1198 = vpop.permute.xlu0 %1197
        %1199 = vrot.lane.b32.xlu0 %v1189, 95
        %v1200 = vpop.permute.xlu0 %1199
        %vm1201 = vcmask 777216
        %v1202 = vsel %vm1201, %v1196, %v1198
        %v1203 = vsel %vm1201, %v1198, %v1200
        %v1205 = vsel %vm520, %v1191, 0
        %v1207 = vsel %vm524, %v1202, 0
        %v1209 = vsel %vm524, %v1203, 0
        %1211 = vmatprep.subr.mxu0 0.0
        %1212 = vmatpush1.msra.mxu0 0.0
        %1213 = vmatprep.subr.mxu0 0.0
        %1214 = vmatpush1.msra.mxu0 0.0
        %1215 = vmatprep.subr.mxu0 0.0
        %1216 = vmatpush1.msra.mxu0 0.0
        %1217 = vmatprep.subr.mxu0 0.0
        %1218 = vmatpush1.msra.mxu0 0.0
        %1219 = vmatprep.subr.mxu0 0.0
        %1220 = vmatpush1.msra.mxu0 0.0
        %1221 = vmatprep.subr.mxu0 0.0
        %1222 = vmatpush1.msra.mxu0 0.0
        %1223 = vmatprep.subr.mxu0 0.0
        %1224 = vmatpush1.msra.mxu0 0.0
        %1225 = vmatprep.subr.mxu0 0.0
        %1226 = vmatpush1.msra.mxu0 0.0
        %1227 = vmatprep.subr.mxu0 0.0
        %1228 = vmatpush1.msra.mxu0 0.0
        %1229 = vmatprep.subr.mxu0 0.0
        %1230 = vmatpush1.msra.mxu0 0.0
        %1231 = vmatprep.subr.mxu0 0.0
        %1232 = vmatpush1.msra.mxu0 0.0
        %1233 = vmatprep.subr.mxu0 0.0
        %1234 = vmatpush1.msra.mxu0 0.0
        %1235 = vmatprep.subr.mxu0 0.0
        %1236 = vmatpush1.msra.mxu0 0.0
        %1237 = vmatprep.subr.mxu0 0.0
        %1238 = vmatpush1.msra.mxu0 0.0
        %1239 = vmatprep.subr.mxu0 0.0
        %1240 = vmatpush1.msra.mxu0 0.0
        %1241 = vmatprep.subr.mxu0 %v1209
        %1242 = vmatpush1.msra.mxu0 %v1207
        %1243 = vmatprep.subr.mxu0 0.0
        %1244 = vmatpush2.msra.mxu0 0.0
        %1245 = vmatprep.subr.mxu0 0.0
        %1246 = vmatpush2.msra.mxu0 0.0
        %1247 = vmatprep.subr.mxu0 0.0
        %1248 = vmatpush2.msra.mxu0 0.0
        %1249 = vmatprep.subr.mxu0 0.0
        %1250 = vmatpush2.msra.mxu0 0.0
        %1251 = vmatprep.subr.mxu0 0.0
        %1252 = vmatpush2.msra.mxu0 0.0
        %1253 = vmatprep.subr.mxu0 0.0
        %1254 = vmatpush2.msra.mxu0 0.0
        %1255 = vmatprep.subr.mxu0 0.0
        %1256 = vmatpush2.msra.mxu0 0.0
        %1257 = vmatprep.subr.mxu0 0.0
        %1258 = vmatpush2.msra.mxu0 0.0
        %1259 = vmatprep.subr.mxu0 0.0
        %1260 = vmatpush2.msra.mxu0 0.0
        %1261 = vmatprep.subr.mxu0 0.0
        %1262 = vmatpush2.msra.mxu0 0.0
        %1263 = vmatprep.subr.mxu0 0.0
        %1264 = vmatpush2.msra.mxu0 0.0
        %1265 = vmatprep.subr.mxu0 0.0
        %1266 = vmatpush2.msra.mxu0 0.0
        %1267 = vmatprep.subr.mxu0 0.0
        %1268 = vmatpush2.msra.mxu0 0.0
        %1269 = vmatprep.subr.mxu0 0.0
        %1270 = vmatpush2.msra.mxu0 0.0
        %1271 = vmatprep.subr.mxu0 0.0
        %1272 = vmatpush2.msra.mxu0 0.0
        %1273 = vmatprep.subr.mxu0 0.0
        %1274 = vmatpush2.msra.mxu0 0.0
        %1275 = vmatprep.mubr.f32.mxu0 0.0
        %1276 = vmatmul.mubr.f32.gmra.mxu0 %v1205
        %v1277 = vpop.f32.mrf.mxu0
        %v1278 = vadd.f32 0.0, %v1277
        %v1279 = vpop.f32.mrf.mxu0
        %v1280 = vadd.f32 0.0, %v1279
        %1281 = vdwg.mxu0
        %v1282 = vadd.f32 %v1186, %v1278
        %v1283 = vadd.f32 %v1187, %v1280
        %v1284 = vld [vmem:[%s464] sm:$0x77]
        %v1285 = vld [vmem:[%s464 + $0x8] sm:$0x7]
        %v1288 = vcombine.high %v1284, %v1284
        %1289 = vrot.lane.b32.xlu0 %v1284, 94
        %v1290 = vpop.permute.xlu0 %1289
        %1291 = vrot.lane.b32.xlu0 %v1288, 94
        %v1292 = vpop.permute.xlu0 %1291
        %1293 = vrot.lane.b32.xlu0 %v1285, 94
        %v1294 = vpop.permute.xlu0 %1293
        %vm1295 = vcmask 769024
        %v1296 = vsel %vm1295, %v1290, %v1292
        %v1297 = vsel %vm1295, %v1292, %v1294
        %v1300 = vsel %vm684, %v1296, 0.0
        %v1301 = vsel %vm685, %v1297, 0.0
        %s1302 = scalar_lea.vmem %s8, 64
        %v1303 = vld [vmem:[%s1302] sm:$0xff]
        %v1305 = vsel %vm520, %v1303, 0
        %v1308 = vsel %vm524, %v1300, 0
        %v1311 = vsel %vm524, %v1301, 0
        %1313 = vmatprep.subr.mxu0 0.0
        %1314 = vmatpush1.msra.mxu0 0.0
        %1315 = vmatprep.subr.mxu0 0.0
        %1316 = vmatpush1.msra.mxu0 0.0
        %1317 = vmatprep.subr.mxu0 0.0
        %1318 = vmatpush1.msra.mxu0 0.0
        %1319 = vmatprep.subr.mxu0 0.0
        %1320 = vmatpush1.msra.mxu0 0.0
        %1321 = vmatprep.subr.mxu0 0.0
        %1322 = vmatpush1.msra.mxu0 0.0
        %1323 = vmatprep.subr.mxu0 0.0
        %1324 = vmatpush1.msra.mxu0 0.0
        %1325 = vmatprep.subr.mxu0 0.0
        %1326 = vmatpush1.msra.mxu0 0.0
        %1327 = vmatprep.subr.mxu0 0.0
        %1328 = vmatpush1.msra.mxu0 0.0
        %1329 = vmatprep.subr.mxu0 0.0
        %1330 = vmatpush1.msra.mxu0 0.0
        %1331 = vmatprep.subr.mxu0 0.0
        %1332 = vmatpush1.msra.mxu0 0.0
        %1333 = vmatprep.subr.mxu0 0.0
        %1334 = vmatpush1.msra.mxu0 0.0
        %1335 = vmatprep.subr.mxu0 0.0
        %1336 = vmatpush1.msra.mxu0 0.0
        %1337 = vmatprep.subr.mxu0 0.0
        %1338 = vmatpush1.msra.mxu0 0.0
        %1339 = vmatprep.subr.mxu0 0.0
        %1340 = vmatpush1.msra.mxu0 0.0
        %1341 = vmatprep.subr.mxu0 0.0
        %1342 = vmatpush1.msra.mxu0 0.0
        %1343 = vmatprep.subr.mxu0 %v1311
        %1344 = vmatpush1.msra.mxu0 %v1308
        %1345 = vmatprep.subr.mxu0 0.0
        %1346 = vmatpush2.msra.mxu0 0.0
        %1347 = vmatprep.subr.mxu0 0.0
        %1348 = vmatpush2.msra.mxu0 0.0
        %1349 = vmatprep.subr.mxu0 0.0
        %1350 = vmatpush2.msra.mxu0 0.0
        %1351 = vmatprep.subr.mxu0 0.0
        %1352 = vmatpush2.msra.mxu0 0.0
        %1353 = vmatprep.subr.mxu0 0.0
        %1354 = vmatpush2.msra.mxu0 0.0
        %1355 = vmatprep.subr.mxu0 0.0
        %1356 = vmatpush2.msra.mxu0 0.0
        %1357 = vmatprep.subr.mxu0 0.0
        %1358 = vmatpush2.msra.mxu0 0.0
        %1359 = vmatprep.subr.mxu0 0.0
        %1360 = vmatpush2.msra.mxu0 0.0
        %1361 = vmatprep.subr.mxu0 0.0
        %1362 = vmatpush2.msra.mxu0 0.0
        %1363 = vmatprep.subr.mxu0 0.0
        %1364 = vmatpush2.msra.mxu0 0.0
        %1365 = vmatprep.subr.mxu0 0.0
        %1366 = vmatpush2.msra.mxu0 0.0
        %1367 = vmatprep.subr.mxu0 0.0
        %1368 = vmatpush2.msra.mxu0 0.0
        %1369 = vmatprep.subr.mxu0 0.0
        %1370 = vmatpush2.msra.mxu0 0.0
        %1371 = vmatprep.subr.mxu0 0.0
        %1372 = vmatpush2.msra.mxu0 0.0
        %1373 = vmatprep.subr.mxu0 0.0
        %1374 = vmatpush2.msra.mxu0 0.0
        %1375 = vmatprep.subr.mxu0 0.0
        %1376 = vmatpush2.msra.mxu0 0.0
        %1377 = vmatprep.mubr.f32.mxu0 0.0
        %1378 = vmatmul.mubr.f32.gmra.mxu0 %v1305
        %v1379 = vpop.f32.mrf.mxu0
        %v1380 = vadd.f32 0.0, %v1379
        %v1381 = vpop.f32.mrf.mxu0
        %v1382 = vadd.f32 0.0, %v1381
        %1383 = vdwg.mxu0
        %v1384 = vadd.f32 %v1282, %v1380
        %v1385 = vadd.f32 %v1283, %v1382
        %v1386 = vld [vmem:[%s9] sm:$0xff]
        %1388 = vset.pattern.permute.xlu0 0
        %1389 = vperm.xlu0 %1388, %v1386
        %v1390 = vpop.permute.xlu0 %1389
        %v1392 = vadd.f32 %v1384, %v1390
        %v1393 = vadd.f32 %v1385, %v1390
        %v1394 = vmax.f32 %v1392, 0.0
        %v1395 = vmax.f32 %v1393, 0.0
        %1396 = vmatprep.subr.mxu0 0.0
        %1397 = vmatpush1.xpose.msra.mxu0 0.0
        %1398 = vmatprep.subr.mxu0 0.0
        %1399 = vmatpush1.xpose.msra.mxu0 0.0
        %1400 = vmatprep.subr.mxu0 0.0
        %1401 = vmatpush1.xpose.msra.mxu0 0.0
        %1402 = vmatprep.subr.mxu0 0.0
        %1403 = vmatpush1.xpose.msra.mxu0 0.0
        %1404 = vmatprep.subr.mxu0 0.0
        %1405 = vmatpush1.xpose.msra.mxu0 0.0
        %1406 = vmatprep.subr.mxu0 0.0
        %1407 = vmatpush1.xpose.msra.mxu0 0.0
        %1408 = vmatprep.subr.mxu0 0.0
        %1409 = vmatpush1.xpose.msra.mxu0 0.0
        %1410 = vmatprep.subr.mxu0 0.0
        %1411 = vmatpush1.xpose.msra.mxu0 0.0
        %1412 = vmatprep.subr.mxu0 0.0
        %1413 = vmatpush1.xpose.msra.mxu0 0.0
        %1414 = vmatprep.subr.mxu0 0.0
        %1415 = vmatpush1.xpose.msra.mxu0 0.0
        %1416 = vmatprep.subr.mxu0 0.0
        %1417 = vmatpush1.xpose.msra.mxu0 0.0
        %1418 = vmatprep.subr.mxu0 0.0
        %1419 = vmatpush1.xpose.msra.mxu0 0.0
        %1420 = vmatprep.subr.mxu0 0.0
        %1421 = vmatpush1.xpose.msra.mxu0 0.0
        %1422 = vmatprep.subr.mxu0 0.0
        %1423 = vmatpush1.xpose.msra.mxu0 0.0
        %1424 = vmatprep.subr.mxu0 0.0
        %1425 = vmatpush1.xpose.msra.mxu0 0.0
        %1426 = vmatprep.subr.mxu0 %v1395
        %1427 = vmatpush1.xpose.msra.mxu0 %v1394
        %1428 = vmatprep.subr.mxu0 0.0
        %1429 = vmatpush2.xpose.msra.mxu0 0.0
        %1430 = vmatprep.subr.mxu0 0.0
        %1431 = vmatpush2.xpose.msra.mxu0 0.0
        %1432 = vmatprep.subr.mxu0 0.0
        %1433 = vmatpush2.xpose.msra.mxu0 0.0
        %1434 = vmatprep.subr.mxu0 0.0
        %1435 = vmatpush2.xpose.msra.mxu0 0.0
        %1436 = vmatprep.subr.mxu0 0.0
        %1437 = vmatpush2.xpose.msra.mxu0 0.0
        %1438 = vmatprep.subr.mxu0 0.0
        %1439 = vmatpush2.xpose.msra.mxu0 0.0
        %1440 = vmatprep.subr.mxu0 0.0
        %1441 = vmatpush2.xpose.msra.mxu0 0.0
        %1442 = vmatprep.subr.mxu0 0.0
        %1443 = vmatpush2.xpose.msra.mxu0 0.0
        %1444 = vmatprep.subr.mxu0 0.0
        %1445 = vmatpush2.xpose.msra.mxu0 0.0
        %1446 = vmatprep.subr.mxu0 0.0
        %1447 = vmatpush2.xpose.msra.mxu0 0.0
        %1448 = vmatprep.subr.mxu0 0.0
        %1449 = vmatpush2.xpose.msra.mxu0 0.0
        %1450 = vmatprep.subr.mxu0 0.0
        %1451 = vmatpush2.xpose.msra.mxu0 0.0
        %1452 = vmatprep.subr.mxu0 0.0
        %1453 = vmatpush2.xpose.msra.mxu0 0.0
        %1454 = vmatprep.subr.mxu0 0.0
        %1455 = vmatpush2.xpose.msra.mxu0 0.0
        %1456 = vmatprep.subr.mxu0 0.0
        %1457 = vmatpush2.xpose.msra.mxu0 0.0
        %1458 = vmatprep.subr.mxu0 0.0
        %1459 = vmatpush2.xpose.msra.mxu0 0.0
        %1460 = vmatprep.mubr.f32.mxu0 0.00390625
        %1461 = vmatmul.mubr.f32.gmra.mxu0 0.00390625
        %v1462 = vpop.f32.mrf.mxu0
        %v1463 = vadd.f32 0.0, %v1462
        %v1464 = vpop.f32.mrf.mxu0
        %1465 = vdwg.mxu0
        %v1466 = vld [vmem:[%s10] sm:$0xff]
        %v1467 = vld [vmem:[%s11] sm:$0x1]
        %vm1468 = vcmask 64512
        %v1470 = vsel %vm1468, %v1463, 0
        %1472 = vmatprep.subr.mxu0 0.0
        %1473 = vmatpush1.msra.mxu0 0.0
        %1474 = vmatprep.subr.mxu0 0.0
        %1475 = vmatpush1.msra.mxu0 0.0
        %1476 = vmatprep.subr.mxu0 0.0
        %1477 = vmatpush1.msra.mxu0 0.0
        %1478 = vmatprep.subr.mxu0 0.0
        %1479 = vmatpush1.msra.mxu0 0.0
        %1480 = vmatprep.subr.mxu0 0.0
        %1481 = vmatpush1.msra.mxu0 0.0
        %1482 = vmatprep.subr.mxu0 0.0
        %1483 = vmatpush1.msra.mxu0 0.0
        %1484 = vmatprep.subr.mxu0 0.0
        %1485 = vmatpush1.msra.mxu0 0.0
        %1486 = vmatprep.subr.mxu0 0.0
        %1487 = vmatpush1.msra.mxu0 0.0
        %1488 = vmatprep.subr.mxu0 0.0
        %1489 = vmatpush1.msra.mxu0 0.0
        %1490 = vmatprep.subr.mxu0 0.0
        %1491 = vmatpush1.msra.mxu0 0.0
        %1492 = vmatprep.subr.mxu0 0.0
        %1493 = vmatpush1.msra.mxu0 0.0
        %1494 = vmatprep.subr.mxu0 0.0
        %1495 = vmatpush1.msra.mxu0 0.0
        %1496 = vmatprep.subr.mxu0 0.0
        %1497 = vmatpush1.msra.mxu0 0.0
        %1498 = vmatprep.subr.mxu0 0.0
        %1499 = vmatpush1.msra.mxu0 0.0
        %1500 = vmatprep.subr.mxu0 0.0
        %1501 = vmatpush1.msra.mxu0 0.0
        %1502 = vmatprep.subr.mxu0 0.0
        %1503 = vmatpush1.msra.mxu0 %v1466
        %1504 = vmatprep.subr.mxu0 0.0
        %1505 = vmatpush2.msra.mxu0 0.0
        %1506 = vmatprep.subr.mxu0 0.0
        %1507 = vmatpush2.msra.mxu0 0.0
        %1508 = vmatprep.subr.mxu0 0.0
        %1509 = vmatpush2.msra.mxu0 0.0
        %1510 = vmatprep.subr.mxu0 0.0
        %1511 = vmatpush2.msra.mxu0 0.0
        %1512 = vmatprep.subr.mxu0 0.0
        %1513 = vmatpush2.msra.mxu0 0.0
        %1514 = vmatprep.subr.mxu0 0.0
        %1515 = vmatpush2.msra.mxu0 0.0
        %1516 = vmatprep.subr.mxu0 0.0
        %1517 = vmatpush2.msra.mxu0 0.0
        %1518 = vmatprep.subr.mxu0 0.0
        %1519 = vmatpush2.msra.mxu0 0.0
        %1520 = vmatprep.subr.mxu0 0.0
        %1521 = vmatpush2.msra.mxu0 0.0
        %1522 = vmatprep.subr.mxu0 0.0
        %1523 = vmatpush2.msra.mxu0 0.0
        %1524 = vmatprep.subr.mxu0 0.0
        %1525 = vmatpush2.msra.mxu0 0.0
        %1526 = vmatprep.subr.mxu0 0.0
        %1527 = vmatpush2.msra.mxu0 0.0
        %1528 = vmatprep.subr.mxu0 0.0
        %1529 = vmatpush2.msra.mxu0 0.0
        %1530 = vmatprep.subr.mxu0 0.0
        %1531 = vmatpush2.msra.mxu0 0.0
        %1532 = vmatprep.subr.mxu0 0.0
        %1533 = vmatpush2.msra.mxu0 0.0
        %1534 = vmatprep.subr.mxu0 0.0
        %1535 = vmatpush2.msra.mxu0 0.0
        %1536 = vmatprep.mubr.f32.mxu0 0.0
        %1537 = vmatmul.mubr.f32.gmra.mxu0 %v1470
        %v1538 = vpop.f32.mrf.mxu0
        %v1539 = vadd.f32 %v1467, %v1538
        %v1540 = vpop.f32.mrf.mxu0
        %1541 = vdwg.mxu0
        %v1542 = vld [vmem:[%s1] sm:$0x3]
        %v1543 = vld [vmem:[%s2] sm:$0xff]
        %v1544 = vld [vmem:[%s2 + $0x8] sm:$0xff]
        %v1545 = vld [vmem:[%s2 + $0x10] sm:$0xff]
        %v1546 = vld [vmem:[%s2 + $0x18] sm:$0xff]
        %v1547 = vld [vmem:[%s2 + $0x20] sm:$0xff]
        %v1548 = vld [vmem:[%s2 + $0x28] sm:$0xff]
        %v1549 = vld [vmem:[%s2 + $0x30] sm:$0xff]
        %v1550 = vld [vmem:[%s2 + $0x38] sm:$0xff]
        %v1551 = vld [vmem:[%s2 + $0x40] sm:$0xff]
        %v1552 = vld [vmem:[%s2 + $0x48] sm:$0xff]
        %v1553 = vld [vmem:[%s2 + $0x50] sm:$0xff]
        %v1554 = vld [vmem:[%s2 + $0x58] sm:$0xff]
        %v1555 = vld [vmem:[%s2 + $0x60] sm:$0xff]
        %v1556 = vld [vmem:[%s2 + $0x68] sm:$0xff]
        %v1557 = vld [vmem:[%s2 + $0x70] sm:$0xff]
        %v1558 = vld [vmem:[%s2 + $0x78] sm:$0xff]
        %v1559 = vld [vmem:[%s2 + $0x80] sm:$0xff]
        %v1560 = vld [vmem:[%s2 + $0x88] sm:$0xff]
        %v1561 = vld [vmem:[%s2 + $0x90] sm:$0xff]
        %v1562 = vld [vmem:[%s2 + $0x98] sm:$0xff]
        %v1563 = vld [vmem:[%s2 + $0xa0] sm:$0xff]
        %v1564 = vld [vmem:[%s2 + $0xa8] sm:$0xff]
        %v1565 = vld [vmem:[%s2 + $0xb0] sm:$0xff]
        %v1566 = vld [vmem:[%s2 + $0xb8] sm:$0xff]
        %v1567 = vld [vmem:[%s2 + $0xc0] sm:$0xff]
        %v1568 = vld [vmem:[%s2 + $0xc8] sm:$0xff]
        %v1569 = vld [vmem:[%s2 + $0xd0] sm:$0xff]
        %v1570 = vld [vmem:[%s2 + $0xd8] sm:$0xff]
        %v1571 = vld [vmem:[%s2 + $0xe0] sm:$0xff]
        %v1572 = vld [vmem:[%s2 + $0xe8] sm:$0xff]
        %v1573 = vld [vmem:[%s2 + $0xf0] sm:$0xff]
        %v1574 = vld [vmem:[%s2 + $0xf8] sm:$0xff]
        %v1575 = vld [vmem:[%s3] sm:$0x1]
        %v1577 = vlaneseq
        %v1578 = vshrl.u32 %v1577, 7
        %v1579 = vsub.s32 0, %v1578
        %v1580 = vrot.slane %v1542, %v1579
        %v1581 = vlaneseq
        %v1582 = vshrl.u32 %v1581, 7
        %v1583 = vsub.s32 1, %v1582
        %v1584 = vrot.slane %v1542, %v1583
        %1587 = vmatprep.subr.mxu0 0.0
        %1588 = vmatpush1.msra.mxu0 %v1558
        %1589 = vmatprep.subr.mxu0 0.0
        %1590 = vmatpush1.msra.mxu0 %v1557
        %1591 = vmatprep.subr.mxu0 0.0
        %1592 = vmatpush1.msra.mxu0 %v1556
        %1593 = vmatprep.subr.mxu0 0.0
        %1594 = vmatpush1.msra.mxu0 %v1555
        %1595 = vmatprep.subr.mxu0 0.0
        %1596 = vmatpush1.msra.mxu0 %v1554
        %1597 = vmatprep.subr.mxu0 0.0
        %1598 = vmatpush1.msra.mxu0 %v1553
        %1599 = vmatprep.subr.mxu0 0.0
        %1600 = vmatpush1.msra.mxu0 %v1552
        %1601 = vmatprep.subr.mxu0 0.0
        %1602 = vmatpush1.msra.mxu0 %v1551
        %1603 = vmatprep.subr.mxu0 0.0
        %1604 = vmatpush1.msra.mxu0 %v1550
        %1605 = vmatprep.subr.mxu0 0.0
        %1606 = vmatpush1.msra.mxu0 %v1549
        %1607 = vmatprep.subr.mxu0 0.0
        %1608 = vmatpush1.msra.mxu0 %v1548
        %1609 = vmatprep.subr.mxu0 0.0
        %1610 = vmatpush1.msra.mxu0 %v1547
        %1611 = vmatprep.subr.mxu0 0.0
        %1612 = vmatpush1.msra.mxu0 %v1546
        %1613 = vmatprep.subr.mxu0 0.0
        %1614 = vmatpush1.msra.mxu0 %v1545
        %1615 = vmatprep.subr.mxu0 0.0
        %1616 = vmatpush1.msra.mxu0 %v1544
        %1617 = vmatprep.subr.mxu0 0.0
        %1618 = vmatpush1.msra.mxu0 %v1543
        %1619 = vmatprep.subr.mxu0 0.0
        %1620 = vmatpush2.msra.mxu0 %v1574
        %1621 = vmatprep.subr.mxu0 0.0
        %1622 = vmatpush2.msra.mxu0 %v1573
        %1623 = vmatprep.subr.mxu0 0.0
        %1624 = vmatpush2.msra.mxu0 %v1572
        %1625 = vmatprep.subr.mxu0 0.0
        %1626 = vmatpush2.msra.mxu0 %v1571
        %1627 = vmatprep.subr.mxu0 0.0
        %1628 = vmatpush2.msra.mxu0 %v1570
        %1629 = vmatprep.subr.mxu0 0.0
        %1630 = vmatpush2.msra.mxu0 %v1569
        %1631 = vmatprep.subr.mxu0 0.0
        %1632 = vmatpush2.msra.mxu0 %v1568
        %1633 = vmatprep.subr.mxu0 0.0
        %1634 = vmatpush2.msra.mxu0 %v1567
        %1635 = vmatprep.subr.mxu0 0.0
        %1636 = vmatpush2.msra.mxu0 %v1566
        %1637 = vmatprep.subr.mxu0 0.0
        %1638 = vmatpush2.msra.mxu0 %v1565
        %1639 = vmatprep.subr.mxu0 0.0
        %1640 = vmatpush2.msra.mxu0 %v1564
        %1641 = vmatprep.subr.mxu0 0.0
        %1642 = vmatpush2.msra.mxu0 %v1563
        %1643 = vmatprep.subr.mxu0 0.0
        %1644 = vmatpush2.msra.mxu0 %v1562
        %1645 = vmatprep.subr.mxu0 0.0
        %1646 = vmatpush2.msra.mxu0 %v1561
        %1647 = vmatprep.subr.mxu0 0.0
        %1648 = vmatpush2.msra.mxu0 %v1560
        %1649 = vmatprep.subr.mxu0 0.0
        %1650 = vmatpush2.msra.mxu0 %v1559
        %1651 = vmatprep.mubr.f32.mxu0 %v1584
        %1652 = vmatmul.mubr.f32.gmra.mxu0 %v1580
        %v1653 = vpop.f32.mrf.mxu0
        %v1654 = vadd.f32 %v1575, %v1653
        %v1655 = vpop.f32.mrf.mxu0
        %1656 = vdwg.mxu0
        %v1657 = vmax.f32 %v1654, 0.0
        %v1658 = vld [vmem:[%s4] sm:$0xff]
        %v1659 = vld [vmem:[%s4 + $0x8] sm:$0xff]
        %v1660 = vld [vmem:[%s4 + $0x10] sm:$0xff]
        %v1661 = vld [vmem:[%s4 + $0x18] sm:$0xff]
        %v1662 = vld [vmem:[%s5] sm:$0x1]
        %vm1663 = vcmask 261120
        %v1665 = vsel %vm1663, %v1657, 0
        %1667 = vmatprep.subr.mxu0 0.0
        %1668 = vmatpush1.msra.mxu0 0.0
        %1669 = vmatprep.subr.mxu0 0.0
        %1670 = vmatpush1.msra.mxu0 0.0
        %1671 = vmatprep.subr.mxu0 0.0
        %1672 = vmatpush1.msra.mxu0 0.0
        %1673 = vmatprep.subr.mxu0 0.0
        %1674 = vmatpush1.msra.mxu0 0.0
        %1675 = vmatprep.subr.mxu0 0.0
        %1676 = vmatpush1.msra.mxu0 0.0
        %1677 = vmatprep.subr.mxu0 0.0
        %1678 = vmatpush1.msra.mxu0 0.0
        %1679 = vmatprep.subr.mxu0 0.0
        %1680 = vmatpush1.msra.mxu0 0.0
        %1681 = vmatprep.subr.mxu0 0.0
        %1682 = vmatpush1.msra.mxu0 0.0
        %1683 = vmatprep.subr.mxu0 0.0
        %1684 = vmatpush1.msra.mxu0 0.0
        %1685 = vmatprep.subr.mxu0 0.0
        %1686 = vmatpush1.msra.mxu0 0.0
        %1687 = vmatprep.subr.mxu0 0.0
        %1688 = vmatpush1.msra.mxu0 0.0
        %1689 = vmatprep.subr.mxu0 0.0
        %1690 = vmatpush1.msra.mxu0 0.0
        %1691 = vmatprep.subr.mxu0 0.0
        %1692 = vmatpush1.msra.mxu0 %v1661
        %1693 = vmatprep.subr.mxu0 0.0
        %1694 = vmatpush1.msra.mxu0 %v1660
        %1695 = vmatprep.subr.mxu0 0.0
        %1696 = vmatpush1.msra.mxu0 %v1659
        %1697 = vmatprep.subr.mxu0 0.0
        %1698 = vmatpush1.msra.mxu0 %v1658
        %1699 = vmatprep.subr.mxu0 0.0
        %1700 = vmatpush2.msra.mxu0 0.0
        %1701 = vmatprep.subr.mxu0 0.0
        %1702 = vmatpush2.msra.mxu0 0.0
        %1703 = vmatprep.subr.mxu0 0.0
        %1704 = vmatpush2.msra.mxu0 0.0
        %1705 = vmatprep.subr.mxu0 0.0
        %1706 = vmatpush2.msra.mxu0 0.0
        %1707 = vmatprep.subr.mxu0 0.0
        %1708 = vmatpush2.msra.mxu0 0.0
        %1709 = vmatprep.subr.mxu0 0.0
        %1710 = vmatpush2.msra.mxu0 0.0
        %1711 = vmatprep.subr.mxu0 0.0
        %1712 = vmatpush2.msra.mxu0 0.0
        %1713 = vmatprep.subr.mxu0 0.0
        %1714 = vmatpush2.msra.mxu0 0.0
        %1715 = vmatprep.subr.mxu0 0.0
        %1716 = vmatpush2.msra.mxu0 0.0
        %1717 = vmatprep.subr.mxu0 0.0
        %1718 = vmatpush2.msra.mxu0 0.0
        %1719 = vmatprep.subr.mxu0 0.0
        %1720 = vmatpush2.msra.mxu0 0.0
        %1721 = vmatprep.subr.mxu0 0.0
        %1722 = vmatpush2.msra.mxu0 0.0
        %1723 = vmatprep.subr.mxu0 0.0
        %1724 = vmatpush2.msra.mxu0 0.0
        %1725 = vmatprep.subr.mxu0 0.0
        %1726 = vmatpush2.msra.mxu0 0.0
        %1727 = vmatprep.subr.mxu0 0.0
        %1728 = vmatpush2.msra.mxu0 0.0
        %1729 = vmatprep.subr.mxu0 0.0
        %1730 = vmatpush2.msra.mxu0 0.0
        %1731 = vmatprep.mubr.f32.mxu0 0.0
        %1732 = vmatmul.mubr.f32.gmra.mxu0 %v1665
        %v1733 = vpop.f32.mrf.mxu0
        %v1734 = vadd.f32 %v1662, %v1733
        %v1735 = vpop.f32.mrf.mxu0
        %1736 = vdwg.mxu0
        %v1737 = vmax.f32 %v1734, 0.0
        %v1738 = vld [vmem:[%s6] sm:$0xff]
        %v1739 = vld [vmem:[%s6 + $0x8] sm:$0xff]
        %v1740 = vld [vmem:[%s6 + $0x10] sm:$0xff]
        %v1741 = vld [vmem:[%s6 + $0x18] sm:$0xff]
        %v1742 = vld [vmem:[%s7] sm:$0x1]
        %v1744 = vsel %vm1663, %v1737, 0
        %1746 = vmatprep.subr.mxu0 0.0
        %1747 = vmatpush1.msra.mxu0 0.0
        %1748 = vmatprep.subr.mxu0 0.0
        %1749 = vmatpush1.msra.mxu0 0.0
        %1750 = vmatprep.subr.mxu0 0.0
        %1751 = vmatpush1.msra.mxu0 0.0
        %1752 = vmatprep.subr.mxu0 0.0
        %1753 = vmatpush1.msra.mxu0 0.0
        %1754 = vmatprep.subr.mxu0 0.0
        %1755 = vmatpush1.msra.mxu0 0.0
        %1756 = vmatprep.subr.mxu0 0.0
        %1757 = vmatpush1.msra.mxu0 0.0
        %1758 = vmatprep.subr.mxu0 0.0
        %1759 = vmatpush1.msra.mxu0 0.0
        %1760 = vmatprep.subr.mxu0 0.0
        %1761 = vmatpush1.msra.mxu0 0.0
        %1762 = vmatprep.subr.mxu0 0.0
        %1763 = vmatpush1.msra.mxu0 0.0
        %1764 = vmatprep.subr.mxu0 0.0
        %1765 = vmatpush1.msra.mxu0 0.0
        %1766 = vmatprep.subr.mxu0 0.0
        %1767 = vmatpush1.msra.mxu0 0.0
        %1768 = vmatprep.subr.mxu0 0.0
        %1769 = vmatpush1.msra.mxu0 0.0
        %1770 = vmatprep.subr.mxu0 0.0
        %1771 = vmatpush1.msra.mxu0 %v1741
        %1772 = vmatprep.subr.mxu0 0.0
        %1773 = vmatpush1.msra.mxu0 %v1740
        %1774 = vmatprep.subr.mxu0 0.0
        %1775 = vmatpush1.msra.mxu0 %v1739
        %1776 = vmatprep.subr.mxu0 0.0
        %1777 = vmatpush1.msra.mxu0 %v1738
        %1778 = vmatprep.subr.mxu0 0.0
        %1779 = vmatpush2.msra.mxu0 0.0
        %1780 = vmatprep.subr.mxu0 0.0
        %1781 = vmatpush2.msra.mxu0 0.0
        %1782 = vmatprep.subr.mxu0 0.0
        %1783 = vmatpush2.msra.mxu0 0.0
        %1784 = vmatprep.subr.mxu0 0.0
        %1785 = vmatpush2.msra.mxu0 0.0
        %1786 = vmatprep.subr.mxu0 0.0
        %1787 = vmatpush2.msra.mxu0 0.0
        %1788 = vmatprep.subr.mxu0 0.0
        %1789 = vmatpush2.msra.mxu0 0.0
        %1790 = vmatprep.subr.mxu0 0.0
        %1791 = vmatpush2.msra.mxu0 0.0
        %1792 = vmatprep.subr.mxu0 0.0
        %1793 = vmatpush2.msra.mxu0 0.0
        %1794 = vmatprep.subr.mxu0 0.0
        %1795 = vmatpush2.msra.mxu0 0.0
        %1796 = vmatprep.subr.mxu0 0.0
        %1797 = vmatpush2.msra.mxu0 0.0
        %1798 = vmatprep.subr.mxu0 0.0
        %1799 = vmatpush2.msra.mxu0 0.0
        %1800 = vmatprep.subr.mxu0 0.0
        %1801 = vmatpush2.msra.mxu0 0.0
        %1802 = vmatprep.subr.mxu0 0.0
        %1803 = vmatpush2.msra.mxu0 0.0
        %1804 = vmatprep.subr.mxu0 0.0
        %1805 = vmatpush2.msra.mxu0 0.0
        %1806 = vmatprep.subr.mxu0 0.0
        %1807 = vmatpush2.msra.mxu0 0.0
        %1808 = vmatprep.subr.mxu0 0.0
        %1809 = vmatpush2.msra.mxu0 0.0
        %1810 = vmatprep.mubr.f32.mxu0 0.0
        %1811 = vmatmul.mubr.f32.gmra.mxu0 %v1744
        %v1812 = vpop.f32.mrf.mxu0
        %v1813 = vadd.f32 %v1742, %v1812
        %v1814 = vpop.f32.mrf.mxu0
        %1815 = vdwg.mxu0
        %v1816 = vld [vmem:[%s12] sm:$0xff]
        %v1817 = vld [vmem:[%s12 + $0x8] sm:$0xff]
        %v1818 = vld [vmem:[%s12 + $0x10] sm:$0xff]
        %v1819 = vld [vmem:[%s12 + $0x18] sm:$0xff]
        %v1821 = vsel %vm1663, %v1539, 0
        %1823 = vmatprep.subr.mxu0 0.0
        %1824 = vmatpush1.msra.mxu0 0.0
        %1825 = vmatprep.subr.mxu0 0.0
        %1826 = vmatpush1.msra.mxu0 0.0
        %1827 = vmatprep.subr.mxu0 0.0
        %1828 = vmatpush1.msra.mxu0 0.0
        %1829 = vmatprep.subr.mxu0 0.0
        %1830 = vmatpush1.msra.mxu0 0.0
        %1831 = vmatprep.subr.mxu0 0.0
        %1832 = vmatpush1.msra.mxu0 0.0
        %1833 = vmatprep.subr.mxu0 0.0
        %1834 = vmatpush1.msra.mxu0 0.0
        %1835 = vmatprep.subr.mxu0 0.0
        %1836 = vmatpush1.msra.mxu0 0.0
        %1837 = vmatprep.subr.mxu0 0.0
        %1838 = vmatpush1.msra.mxu0 0.0
        %1839 = vmatprep.subr.mxu0 0.0
        %1840 = vmatpush1.msra.mxu0 0.0
        %1841 = vmatprep.subr.mxu0 0.0
        %1842 = vmatpush1.msra.mxu0 0.0
        %1843 = vmatprep.subr.mxu0 0.0
        %1844 = vmatpush1.msra.mxu0 0.0
        %1845 = vmatprep.subr.mxu0 0.0
        %1846 = vmatpush1.msra.mxu0 0.0
        %1847 = vmatprep.subr.mxu0 0.0
        %1848 = vmatpush1.msra.mxu0 %v1819
        %1849 = vmatprep.subr.mxu0 0.0
        %1850 = vmatpush1.msra.mxu0 %v1818
        %1851 = vmatprep.subr.mxu0 0.0
        %1852 = vmatpush1.msra.mxu0 %v1817
        %1853 = vmatprep.subr.mxu0 0.0
        %1854 = vmatpush1.msra.mxu0 %v1816
        %1855 = vmatprep.subr.mxu0 0.0
        %1856 = vmatpush2.msra.mxu0 0.0
        %1857 = vmatprep.subr.mxu0 0.0
        %1858 = vmatpush2.msra.mxu0 0.0
        %1859 = vmatprep.subr.mxu0 0.0
        %1860 = vmatpush2.msra.mxu0 0.0
        %1861 = vmatprep.subr.mxu0 0.0
        %1862 = vmatpush2.msra.mxu0 0.0
        %1863 = vmatprep.subr.mxu0 0.0
        %1864 = vmatpush2.msra.mxu0 0.0
        %1865 = vmatprep.subr.mxu0 0.0
        %1866 = vmatpush2.msra.mxu0 0.0
        %1867 = vmatprep.subr.mxu0 0.0
        %1868 = vmatpush2.msra.mxu0 0.0
        %1869 = vmatprep.subr.mxu0 0.0
        %1870 = vmatpush2.msra.mxu0 0.0
        %1871 = vmatprep.subr.mxu0 0.0
        %1872 = vmatpush2.msra.mxu0 0.0
        %1873 = vmatprep.subr.mxu0 0.0
        %1874 = vmatpush2.msra.mxu0 0.0
        %1875 = vmatprep.subr.mxu0 0.0
        %1876 = vmatpush2.msra.mxu0 0.0
        %1877 = vmatprep.subr.mxu0 0.0
        %1878 = vmatpush2.msra.mxu0 0.0
        %1879 = vmatprep.subr.mxu0 0.0
        %1880 = vmatpush2.msra.mxu0 0.0
        %1881 = vmatprep.subr.mxu0 0.0
        %1882 = vmatpush2.msra.mxu0 0.0
        %1883 = vmatprep.subr.mxu0 0.0
        %1884 = vmatpush2.msra.mxu0 0.0
        %1885 = vmatprep.subr.mxu0 0.0
        %1886 = vmatpush2.msra.mxu0 0.0
        %1887 = vmatprep.mubr.f32.mxu0 0.0
        %1888 = vmatmul.mubr.f32.gmra.mxu0 %v1821
        %v1889 = vpop.f32.mrf.mxu0
        %v1890 = vadd.f32 0.0, %v1889
        %v1891 = vpop.f32.mrf.mxu0
        %1892 = vdwg.mxu0
        %v1893 = vmul.f32 %v1890, %v1813
        %v1894 = vld [vmem:[%s13] sm:$0xff]
        %v1895 = vld [vmem:[%s13 + $0x8] sm:$0xff]
        %v1896 = vld [vmem:[%s13 + $0x10] sm:$0xff]
        %v1897 = vld [vmem:[%s13 + $0x18] sm:$0xff]
        %v1898 = vld [vmem:[%s13 + $0x20] sm:$0xff]
        %v1899 = vld [vmem:[%s13 + $0x28] sm:$0xff]
        %v1900 = vld [vmem:[%s13 + $0x30] sm:$0xff]
        %v1901 = vld [vmem:[%s13 + $0x38] sm:$0xff]
        %v1902 = vld [vmem:[%s13 + $0x40] sm:$0xff]
        %v1903 = vld [vmem:[%s13 + $0x48] sm:$0xff]
        %v1904 = vld [vmem:[%s13 + $0x50] sm:$0xff]
        %v1905 = vld [vmem:[%s13 + $0x58] sm:$0xff]
        %v1906 = vld [vmem:[%s13 + $0x60] sm:$0xff]
        %v1907 = vld [vmem:[%s13 + $0x68] sm:$0xff]
        %v1908 = vld [vmem:[%s13 + $0x70] sm:$0xff]
        %v1909 = vld [vmem:[%s13 + $0x78] sm:$0xff]
        %1910 = vmatprep.subr.mxu0 0.0
        %1911 = vmatpush1.msra.mxu0 %v1909
        %1912 = vmatprep.subr.mxu0 0.0
        %1913 = vmatpush1.msra.mxu0 %v1908
        %1914 = vmatprep.subr.mxu0 0.0
        %1915 = vmatpush1.msra.mxu0 %v1907
        %1916 = vmatprep.subr.mxu0 0.0
        %1917 = vmatpush1.msra.mxu0 %v1906
        %1918 = vmatprep.subr.mxu0 0.0
        %1919 = vmatpush1.msra.mxu0 %v1905
        %1920 = vmatprep.subr.mxu0 0.0
        %1921 = vmatpush1.msra.mxu0 %v1904
        %1922 = vmatprep.subr.mxu0 0.0
        %1923 = vmatpush1.msra.mxu0 %v1903
        %1924 = vmatprep.subr.mxu0 0.0
        %1925 = vmatpush1.msra.mxu0 %v1902
        %1926 = vmatprep.subr.mxu0 0.0
        %1927 = vmatpush1.msra.mxu0 %v1901
        %1928 = vmatprep.subr.mxu0 0.0
        %1929 = vmatpush1.msra.mxu0 %v1900
        %1930 = vmatprep.subr.mxu0 0.0
        %1931 = vmatpush1.msra.mxu0 %v1899
        %1932 = vmatprep.subr.mxu0 0.0
        %1933 = vmatpush1.msra.mxu0 %v1898
        %1934 = vmatprep.subr.mxu0 0.0
        %1935 = vmatpush1.msra.mxu0 %v1897
        %1936 = vmatprep.subr.mxu0 0.0
        %1937 = vmatpush1.msra.mxu0 %v1896
        %1938 = vmatprep.subr.mxu0 0.0
        %1939 = vmatpush1.msra.mxu0 %v1895
        %1940 = vmatprep.subr.mxu0 0.0
        %1941 = vmatpush1.msra.mxu0 %v1894
        %1942 = vmatprep.subr.mxu0 0.0
        %1943 = vmatpush2.msra.mxu0 0.0
        %1944 = vmatprep.subr.mxu0 0.0
        %1945 = vmatpush2.msra.mxu0 0.0
        %1946 = vmatprep.subr.mxu0 0.0
        %1947 = vmatpush2.msra.mxu0 0.0
        %1948 = vmatprep.subr.mxu0 0.0
        %1949 = vmatpush2.msra.mxu0 0.0
        %1950 = vmatprep.subr.mxu0 0.0
        %1951 = vmatpush2.msra.mxu0 0.0
        %1952 = vmatprep.subr.mxu0 0.0
        %1953 = vmatpush2.msra.mxu0 0.0
        %1954 = vmatprep.subr.mxu0 0.0
        %1955 = vmatpush2.msra.mxu0 0.0
        %1956 = vmatprep.subr.mxu0 0.0
        %1957 = vmatpush2.msra.mxu0 0.0
        %1958 = vmatprep.subr.mxu0 0.0
        %1959 = vmatpush2.msra.mxu0 0.0
        %1960 = vmatprep.subr.mxu0 0.0
        %1961 = vmatpush2.msra.mxu0 0.0
        %1962 = vmatprep.subr.mxu0 0.0
        %1963 = vmatpush2.msra.mxu0 0.0
        %1964 = vmatprep.subr.mxu0 0.0
        %1965 = vmatpush2.msra.mxu0 0.0
        %1966 = vmatprep.subr.mxu0 0.0
        %1967 = vmatpush2.msra.mxu0 0.0
        %1968 = vmatprep.subr.mxu0 0.0
        %1969 = vmatpush2.msra.mxu0 0.0
        %1970 = vmatprep.subr.mxu0 0.0
        %1971 = vmatpush2.msra.mxu0 0.0
        %1972 = vmatprep.subr.mxu0 0.0
        %1973 = vmatpush2.msra.mxu0 0.0
        %1974 = vmatprep.mubr.f32.mxu0 0.0
        %1975 = vmatmul.mubr.f32.gmra.mxu0 %v1893
        %v1976 = vpop.f32.mrf.mxu0
        %v1977 = vadd.f32 0.0, %v1976
        %v1978 = vpop.f32.mrf.mxu0
        %1979 = vdwg.mxu0
        %vm1980 = vcmask 24576
        %1981 = vst.msk [vmem:[%s459] sm:$0x1] %vm1980, %v1977
        %s1982 = sand.u32 %s335, 1
        %s1983 = scalar_lea.sflag [#allocation3], %s1982
        %s1984 = sand.u32 %s335, 1
        %s1985 = scalar_lea.vmem [#allocation2], %s1984
        // Predicated region
        $region77: #{forward.1} parent=75 // pred_check
          %p1986 = pneg %p345
        $region78: #{forward.1} parent=75 // pred_check_branch
          %1988 = sbr.rel (%p1986) target = $region80
        $region79: #{forward.1} parent=75 // pred_region
          %s1990 = ssub.s32 16, 16
          %1991 = vsyncadd %s1983, %s1990
          %s1992 = smul.addr %s28, 16
          %s1993 = scalar_lea.hbm %s14, %s1992
          %s1995 = sshll.u32 %s1985, 4
          %s1996 = int_to_ptr.vmem [resolvable:$true] %s1995
          %1998 = dma.vmem_to_hbm [thread:$0]  %s1996, 16, %s1993, %s1983
        $region80: #{forward.1} parent=75 // pred_fallthru
          _
      $region76: #{forward.1} parent=5 // pred_fallthru
        _
      %p1999 = scmp.le.s32.totalorder 2, %s23
      // Predicated region
      $region81: #{forward.1} parent=5 // pred_check
        %p2000 = pneg %p1999
      $region82: #{forward.1} parent=5 // pred_check_branch
        %2002 = sbr.rel (%p2000) target = $region84
      $region83: #{forward.1} parent=5 // pred_region
        %s2003 = ssub.s32 %s23, 2
        // Predicated region
        $region85: #{forward.1} parent=83 // pred_check
          %p2004 = pneg %p351
        $region86: #{forward.1} parent=83 // pred_check_branch
          %2006 = sbr.rel (%p2004) target = $region88
        $region87: #{forward.1} parent=83 // pred_region
          %s2007 = sand.u32 %s336, 1
          %s2008 = scalar_lea.sflag [#allocation3], %s2007
          %s2009 = sand.u32 %s336, 1
          %s2010 = scalar_lea.vmem [#allocation2], %s2009
          %2011 = dma.done %s2008, 16
        $region88: #{forward.1} parent=83 // pred_fallthru
          _
      $region84: #{forward.1} parent=5 // pred_fallthru
        _
    $region6: #{forward.1} parent=1 // loop_footer
      %s27 = sadd.s32 1, %s23
    $region7: #{forward.1} parent=1 // loop_footer_branch
      %22 = sbr.rel target = $region3
    $region8: #{forward.1} parent=1 // loop_exit
      _
    %2012 = vsyncpa [#allocation3], 1
    %s2013 = scalar_lea.sflag [#allocation3], 1
    %2014 = vsyncpa %s2013, 1

</llo_original>
